<compile_context>
chip_gen: v5e
topology: v5e:2x2
jax: 0.10.0
libtpu: 0.0.40
codegen_flags: <defaults>
</compile_context>

<pallas_src>
import functools

import jax
import jax.numpy as jnp
from jax.experimental import pallas as pl
from jax.experimental.pallas import tpu as pltpu

EPS = 1e-5   # PyTorch LayerNorm default
LANE = 128


def _round_up(a, b):
    return (a + b - 1) // b * b


def _cdiv(a, b):
    return (a + b - 1) // b


def _default_conv_dtype():
    # bf16 tap multiplies halve conv-stage VMEM load traffic on v6e/v7x
    # (bf16 VALU); keep f32 on v5-and-older chips (no bf16 VALU -> no win).
    try:
        kind = jax.devices()[0].device_kind.lower()
        if any(v in kind for v in ("v2", "v3", "v4", "v5")):
            return jnp.float32
    except Exception:
        pass
    return jnp.bfloat16


def _layer_norm_fused(x, gamma, beta, true_d):
    """One-pass LayerNorm over the last axis.

    Padded lanes of `x` are exactly zero, so summing over all (padded) lanes
    and dividing by the true feature dim gives correct statistics; padded
    gamma/beta are zero so padded output lanes stay exactly zero.
    """
    inv_d = 1.0 / true_d
    mean = jnp.sum(x, axis=-1, keepdims=True) * inv_d
    ex2 = jnp.sum(x * x, axis=-1, keepdims=True) * inv_d
    var = jnp.maximum(ex2 - mean * mean, 0.0)
    return (x - mean) * jax.lax.rsqrt(var + EPS) * gamma + beta


def _conformer_conv_kernel(
    x_hbm,       # (B, S_pad, Dp) f32 in HBM (pl.ANY) — manual windowed DMA
    ln1_g_ref,   # (1, Dp)  f32
    ln1_b_ref,   # (1, Dp)  f32
    w1_ref,      # (Dp, 2*Dp) bf16  fused [value | gate] projection
    b1_ref,      # (1, 2*Dp)  f32
    convw_ref,   # (K, Dp)   conv_dtype; convw[k, c] == torch conv.weight[c, 0, k]
    convb_ref,   # (1, Dp)  f32
    ln2_g_ref,   # (1, Dp)  f32
    ln2_b_ref,   # (1, Dp)  f32
    w2_ref,      # (Dp, Dp) bf16
    b2_ref,      # (1, Dp)  f32
    o_ref,       # (1, T, Dp)
    xbuf,        # VMEM scratch (2, T_ext, Dp) f32 — double-buffered input window
    dma_sem,     # DMA semaphores (2,)
    conv_buf,    # VMEM scratch (T_ext, Dp) conv_dtype
    *,
    true_d, seq_len, kernel_size, pad, tile_n, tile_ext, dp,
):
    b = pl.program_id(0)
    t = pl.program_id(1)
    nt = pl.num_programs(1)
    slot = jax.lax.rem(t, 2)

    def window(bb, tt):
        # padded-coordinate window [tt*T, tt*T + T_ext) — always in-bounds
        return x_hbm.at[bb, pl.ds(tt * tile_n, tile_ext), :]

    def start_fetch(bb, tt, s):
        pltpu.make_async_copy(window(bb, tt), xbuf.at[s], dma_sem.at[s]).start()

    # Prime this batch-row's pipeline (t == 0 holds for the first step of every
    # batch row, so this stays correct if the batch axis is core-split).
    @pl.when(t == 0)
    def _():
        start_fetch(b, t, slot)

    # Prefetch the next sequence tile of the same batch row.
    @pl.when(t + 1 < nt)
    def _():
        start_fetch(b, t + 1, 1 - slot)

    pltpu.make_async_copy(window(b, t), xbuf.at[slot], dma_sem.at[slot]).wait()
    x = xbuf[slot]                                    # (T_ext, Dp) f32

    # --- LayerNorm(dim) ---
    xn = _layer_norm_fused(x, ln1_g_ref[0], ln1_b_ref[0], true_d)

    # --- Linear(dim, 2*dim) + GLU(dim=1): ONE bf16 matmul, 128-aligned split ---
    xn16 = xn.astype(jnp.bfloat16)
    y = jnp.dot(xn16, w1_ref[...], preferred_element_type=jnp.float32) + b1_ref[0]
    a = y[:, :dp]                                     # value half (lane-aligned slice)
    g = y[:, dp:]                                     # gate half
    glu = a * jax.nn.sigmoid(g)                       # (T_ext, Dp) f32

    # Zero rows outside the true sequence: reproduces the depthwise conv's zero
    # padding at sequence edges and kills halo / tail-pad rows.
    row = jax.lax.broadcasted_iota(jnp.int32, (tile_ext, 1), 0) + (
        t * tile_n - pad)
    glu = jnp.where((row >= 0) & (row < seq_len), glu, 0.0)

    # --- depthwise Conv1d(dim, dim, K, padding=(K-1)//2, groups=dim) ---
    conv_buf[...] = glu.astype(conv_buf.dtype)        # one store; taps read windows
    cw = convw_ref[...]                               # hoisted (K, Dp) load
    acc = convb_ref[...] + (
        conv_buf[pl.ds(0, tile_n), :] * cw[0]).astype(jnp.float32)
    for k in range(1, kernel_size):                   # static unrolled taps (VPU)
        acc = acc + (conv_buf[pl.ds(k, tile_n), :] * cw[k]).astype(jnp.float32)

    # --- LayerNorm(dim) -> SiLU -> Linear(dim, dim); Dropout(p=0) = identity ---
    cn = _layer_norm_fused(acc, ln2_g_ref[0], ln2_b_ref[0], true_d)
    s = cn * jax.nn.sigmoid(cn)
    z = jnp.dot(s.astype(jnp.bfloat16), w2_ref[...],
                preferred_element_type=jnp.float32) + b2_ref[0]

    o_ref[0] = z.astype(o_ref.dtype)


def _pad_to(a, shape):
    return jnp.pad(a, [(0, t - s) for s, t in zip(a.shape, shape)])


def conformer_conv_module(x, params, *, tile_n=256, conv_dtype=None,
                          vmem_limit_bytes=None):
    """x: (B, N, D) float32 -> (B, N, D) float32."""
    B, N, D = x.shape
    K = params["conv_w"].shape[0]
    # 'same' padding (K-1)//2 only matches PyTorch/lucidrains for odd K.
    assert K % 2 == 1, "depthwise conv 'same' padding requires odd kernel_size"
    pad = (K - 1) // 2
    if conv_dtype is None:
        conv_dtype = _default_conv_dtype()

    Dp = _round_up(D, LANE)                            # lane-dense channels
    T = _round_up(min(tile_n, _round_up(N, 8)), 8)     # sequence tile
    n_tiles = _cdiv(N, T)
    n_round = n_tiles * T
    t_ext = _round_up(T + K - 1, 16)                   # aligned tile + conv halo

    # Single pad of x so tile t's halo window is x_p[:, t*T : t*T + t_ext, :]
    # (front pad = conv pad; back pad sized so the last window is in-bounds).
    seq_pad = _round_up(pad + (n_tiles - 1) * T + t_ext, 8)
    x_p = jnp.pad(x, ((0, 0), (pad, seq_pad - pad - N), (0, Dp - D)))

    # --- parameters: pad channels to Dp, fuse GLU halves, bf16 matmul weights ---
    f32, bf16 = jnp.float32, jnp.bfloat16
    ln1_g = _pad_to(params["ln1_g"], (1, Dp)).astype(f32)
    ln1_b = _pad_to(params["ln1_b"], (1, Dp)).astype(f32)
    ln2_g = _pad_to(params["ln2_g"], (1, Dp)).astype(f32)
    ln2_b = _pad_to(params["ln2_b"], (1, Dp)).astype(f32)
    w1 = jnp.zeros((Dp, 2 * Dp), f32)
    w1 = w1.at[:D, :D].set(params["w1"][:, :D])            # value cols [0, Dp)
    w1 = w1.at[:D, Dp:Dp + D].set(params["w1"][:, D:])     # gate cols [Dp, 2Dp)
    w1 = w1.astype(bf16)
    b1 = jnp.zeros((1, 2 * Dp), f32)
    b1 = b1.at[:, :D].set(params["b1"][:, :D])
    b1 = b1.at[:, Dp:Dp + D].set(params["b1"][:, D:])
    conv_w = _pad_to(params["conv_w"], (K, Dp)).astype(conv_dtype)
    conv_b = _pad_to(params["conv_b"], (1, Dp)).astype(f32)
    w2 = _pad_to(params["w2"], (Dp, Dp)).astype(bf16)
    b2 = _pad_to(params["b2"], (1, Dp)).astype(f32)

    def const_spec(shape):
        return pl.BlockSpec(shape, lambda b, t: (0,) * len(shape))

    in_specs = [
        pl.BlockSpec(memory_space=pl.ANY),                 # x: HBM, manual DMA
        const_spec((1, Dp)), const_spec((1, Dp)),          # ln1 g/b
        const_spec((Dp, 2 * Dp)), const_spec((1, 2 * Dp)),  # w1 (fused), b1
        const_spec((K, Dp)), const_spec((1, Dp)),          # conv w/b
        const_spec((1, Dp)), const_spec((1, Dp)),          # ln2 g/b
        const_spec((Dp, Dp)), const_spec((1, Dp)),         # w2, b2
    ]
    out_spec = pl.BlockSpec((1, T, Dp), lambda b, t: (b, t, 0))

    kernel = functools.partial(
        _conformer_conv_kernel,
        true_d=D, seq_len=N, kernel_size=K, pad=pad,
        tile_n=T, tile_ext=t_ext, dp=Dp)

    rows_ext = B * n_tiles * t_ext
    rows_out = B * n_round
    flops = (2 * rows_ext * Dp * (2 * Dp)       # fused GLU projection
             + 2 * rows_out * Dp * Dp           # output projection
             + 2 * rows_out * Dp * K)           # depthwise conv
    bytes_accessed = 4 * (x_p.size + rows_out * Dp) + 2 * (w1.size + w2.size)
    cost = pl.CostEstimate(flops=flops,
                           transcendentals=(rows_ext + rows_out) * Dp,
                           bytes_accessed=bytes_accessed)

    out = pl.pallas_call(
        kernel,
        out_shape=jax.ShapeDtypeStruct((B, n_round, Dp), x.dtype),
        grid=(B, n_tiles),
        in_specs=in_specs,
        out_specs=out_spec,
        scratch_shapes=[
            pltpu.VMEM((2, t_ext, Dp), jnp.float32),       # double-buffered window
            pltpu.SemaphoreType.DMA((2,)),
            pltpu.VMEM((t_ext, Dp), conv_dtype),           # conv tap buffer
        ],
        compiler_params=pltpu.CompilerParams(
            dimension_semantics=("parallel", "arbitrary"),
            vmem_limit_bytes=vmem_limit_bytes),
        cost_estimate=cost,
    )(x_p, ln1_g, ln1_b, w1, b1, conv_w, conv_b, ln2_g, ln2_b, w2, b2)

    # Lane/row-aligned case needs no trim copy at all.
    if n_round == N and Dp == D:
        return out
    return out[:, :N, :D]


# ----------------------------- pure-JAX reference -----------------------------

def _ln_ref(x, gamma, beta):
    mu = jnp.mean(x, axis=-1, keepdims=True)
    var = jnp.mean((x - mu) ** 2, axis=-1, keepdims=True)
    return (x - mu) * jax.lax.rsqrt(var + EPS) * gamma + beta


def reference(x, params):
    """f32 mirror of the PyTorch forward."""
    B, N, D = x.shape
    xn = _ln_ref(x, params["ln1_g"][0], params["ln1_b"][0])
    y = xn @ params["w1"] + params["b1"][0]
    glu = y[..., :D] * jax.nn.sigmoid(y[..., D:])
    K = params["conv_w"].shape[0]
    pad = (K - 1) // 2
    padded = jnp.pad(glu, ((0, 0), (pad, pad), (0, 0)))
    conv = jnp.zeros_like(glu) + params["conv_b"][0]
    for k in range(K):
        conv = conv + padded[:, k:k + N, :] * params["conv_w"][k]
    cn = _ln_ref(conv, params["ln2_g"][0], params["ln2_b"][0])
    s = cn * jax.nn.sigmoid(cn)
    return s @ params["w2"] + params["b2"][0]


def init_params(key, dim, kernel_size):
    ks = jax.random.split(key, 6)
    scale = 0.1
    return {
        "ln1_g": jnp.ones((1, dim), jnp.float32),
        "ln1_b": jnp.zeros((1, dim), jnp.float32),
        "w1": scale * jax.random.normal(ks[0], (dim, 2 * dim), jnp.float32),
        "b1": scale * jax.random.normal(ks[1], (1, 2 * dim), jnp.float32),
        "conv_w": scale * jax.random.normal(ks[2], (kernel_size, dim), jnp.float32),
        "conv_b": scale * jax.random.normal(ks[3], (1, dim), jnp.float32),
        "ln2_g": jnp.ones((1, dim), jnp.float32),
        "ln2_b": jnp.zeros((1, dim), jnp.float32),
        "w2": scale * jax.random.normal(ks[4], (dim, dim), jnp.float32),
        "b2": scale * jax.random.normal(ks[5], (1, dim), jnp.float32),
    }


if __name__ == "__main__":
    B, N, D, K = 2, 40, 32, 15          # small shapes; N deliberately not a tile multiple
    key = jax.random.PRNGKey(0)
    kx, kp = jax.random.split(key)
    x = jax.random.normal(kx, (B, N, D), jnp.float32)
    params = init_params(kp, D, K)

    # tile_n=16 exercises the multi-tile halo-DMA / prefetch path even at this
    # tiny N (production default is tile_n=256).
    out = conformer_conv_module(x, params, tile_n=16)
    out = jax.block_until_ready(out)

    ref = reference(x, params)
    assert out.shape == (B, N, D)
    max_err = float(jnp.max(jnp.abs(out - ref)))
    mean_err = float(jnp.mean(jnp.abs(out - ref)))
    # bf16 MXU matmuls + bf16 conv taps (f32 accumulation everywhere) -> looser
    # tolerance vs. the pure-f32 reference.
    assert max_err < 1.25e-1, f"max mismatch vs reference: {max_err}"
    assert mean_err < 1.5e-2, f"mean mismatch vs reference: {mean_err}"

    print("KERNEL_OK")
</pallas_src>

<mosaic_0001>
module attributes {stable_mosaic.version = 11 : i64} {
  func.func @_conformer_conv_kernel(%arg0: i32, %arg1: i32, %arg2: memref<2x72x128xf32, #tpu.memory_space<any>>, %arg3: memref<1x128xf32, #tpu.memory_space<vmem>>, %arg4: memref<1x128xf32, #tpu.memory_space<vmem>>, %arg5: memref<128x256xbf16, #tpu.memory_space<vmem>>, %arg6: memref<1x256xf32, #tpu.memory_space<vmem>>, %arg7: memref<15x128xbf16, #tpu.memory_space<vmem>>, %arg8: memref<1x128xf32, #tpu.memory_space<vmem>>, %arg9: memref<1x128xf32, #tpu.memory_space<vmem>>, %arg10: memref<1x128xf32, #tpu.memory_space<vmem>>, %arg11: memref<128x128xbf16, #tpu.memory_space<vmem>>, %arg12: memref<1x128xf32, #tpu.memory_space<vmem>>, %arg13: memref<1x16x128xf32, #tpu.memory_space<vmem>>, %arg14: memref<2x32x128xf32, #tpu.memory_space<vmem>>, %arg15: memref<2x!tpu.dma_semaphore, #tpu.memory_space<semaphore_mem>>, %arg16: memref<32x128xbf16, #tpu.memory_space<vmem>>) attributes {dimension_semantics = [#tpu.dimension_semantics<parallel>, #tpu.dimension_semantics<arbitrary>], iteration_bounds = array<i64: 2, 3>, scalar_prefetch = 0 : i64, scratch_operands = 3 : i64, tpu.core_type = #tpu.core_type<tc>, window_params = [{}, {pipeline_mode = #tpu.pipeline_mode<synchronous>, transform_indices = @transform_1, window_bounds = array<i64: 1, 128>}, {pipeline_mode = #tpu.pipeline_mode<synchronous>, transform_indices = @transform_2, window_bounds = array<i64: 1, 128>}, {pipeline_mode = #tpu.pipeline_mode<synchronous>, transform_indices = @transform_3, window_bounds = array<i64: 128, 256>}, {pipeline_mode = #tpu.pipeline_mode<synchronous>, transform_indices = @transform_4, window_bounds = array<i64: 1, 256>}, {pipeline_mode = #tpu.pipeline_mode<synchronous>, transform_indices = @transform_5, window_bounds = array<i64: 15, 128>}, {pipeline_mode = #tpu.pipeline_mode<synchronous>, transform_indices = @transform_6, window_bounds = array<i64: 1, 128>}, {pipeline_mode = #tpu.pipeline_mode<synchronous>, transform_indices = @transform_7, window_bounds = array<i64: 1, 128>}, {pipeline_mode = #tpu.pipeline_mode<synchronous>, transform_indices = @transform_8, window_bounds = array<i64: 1, 128>}, {pipeline_mode = #tpu.pipeline_mode<synchronous>, transform_indices = @transform_9, window_bounds = array<i64: 128, 128>}, {pipeline_mode = #tpu.pipeline_mode<synchronous>, transform_indices = @transform_10, window_bounds = array<i64: 1, 128>}, {transform_indices = @transform_11, window_bounds = array<i64: 1, 16, 128>}]} {
    %c2_i32 = arith.constant 2 : i32
    %0 = arith.remsi %arg1, %c2_i32 : i32
    %c0_i32 = arith.constant 0 : i32
    %1 = arith.cmpi eq, %arg1, %c0_i32 : i32
    %2 = arith.extui %1 : i1 to i32
    %c0_i32_0 = arith.constant 0 : i32
    %3 = arith.cmpi ne, %2, %c0_i32_0 : i32
    scf.if %3 {
      %c16_i32_65 = arith.constant 16 : i32
      %250 = arith.muli %arg1, %c16_i32_65 : i32
      %c0_i32_66 = arith.constant 0 : i32
      %251 = tpu.memref_slice %arg2[%arg0, %250, %c0_i32_66] : memref<2x72x128xf32, #tpu.memory_space<any>> -> memref<1x32x128xf32, #tpu.memory_space<any>>
      %252 = tpu.memref_squeeze %251 : memref<1x32x128xf32, #tpu.memory_space<any>> -> memref<32x128xf32, #tpu.memory_space<any>>
      %c0_i32_67 = arith.constant 0 : i32
      %c0_i32_68 = arith.constant 0 : i32
      %253 = tpu.memref_slice %arg14[%0, %c0_i32_67, %c0_i32_68] : memref<2x32x128xf32, #tpu.memory_space<vmem>> -> memref<1x32x128xf32, #tpu.memory_space<vmem>>
      %254 = tpu.memref_squeeze %253 : memref<1x32x128xf32, #tpu.memory_space<vmem>> -> memref<32x128xf32, #tpu.memory_space<vmem>>
      %255 = tpu.memref_slice %arg15[%0] : memref<2x!tpu.dma_semaphore, #tpu.memory_space<semaphore_mem>> -> memref<1x!tpu.dma_semaphore, #tpu.memory_space<semaphore_mem>>
      %256 = tpu.memref_squeeze %255 : memref<1x!tpu.dma_semaphore, #tpu.memory_space<semaphore_mem>> -> memref<!tpu.dma_semaphore, #tpu.memory_space<semaphore_mem>>
      tpu.enqueue_dma source(%252 : memref<32x128xf32, #tpu.memory_space<any>>) target(%254 : memref<32x128xf32, #tpu.memory_space<vmem>>) target_semaphore(%256 : memref<!tpu.dma_semaphore, #tpu.memory_space<semaphore_mem>>)
    } else {
    }
    %c1_i32 = arith.constant 1 : i32
    %4 = arith.addi %arg1, %c1_i32 : i32
    %c3_i32 = arith.constant 3 : i32
    %5 = arith.cmpi slt, %4, %c3_i32 : i32
    %6 = arith.extui %5 : i1 to i32
    %c0_i32_1 = arith.constant 0 : i32
    %7 = arith.cmpi ne, %6, %c0_i32_1 : i32
    scf.if %7 {
      %c1_i32_65 = arith.constant 1 : i32
      %250 = arith.addi %arg1, %c1_i32_65 : i32
      %c1_i32_66 = arith.constant 1 : i32
      %251 = arith.subi %c1_i32_66, %0 : i32
      %c16_i32_67 = arith.constant 16 : i32
      %252 = arith.muli %250, %c16_i32_67 : i32
      %c0_i32_68 = arith.constant 0 : i32
      %253 = tpu.memref_slice %arg2[%arg0, %252, %c0_i32_68] : memref<2x72x128xf32, #tpu.memory_space<any>> -> memref<1x32x128xf32, #tpu.memory_space<any>>
      %254 = tpu.memref_squeeze %253 : memref<1x32x128xf32, #tpu.memory_space<any>> -> memref<32x128xf32, #tpu.memory_space<any>>
      %c0_i32_69 = arith.constant 0 : i32
      %c0_i32_70 = arith.constant 0 : i32
      %255 = tpu.memref_slice %arg14[%251, %c0_i32_69, %c0_i32_70] : memref<2x32x128xf32, #tpu.memory_space<vmem>> -> memref<1x32x128xf32, #tpu.memory_space<vmem>>
      %256 = tpu.memref_squeeze %255 : memref<1x32x128xf32, #tpu.memory_space<vmem>> -> memref<32x128xf32, #tpu.memory_space<vmem>>
      %257 = tpu.memref_slice %arg15[%251] : memref<2x!tpu.dma_semaphore, #tpu.memory_space<semaphore_mem>> -> memref<1x!tpu.dma_semaphore, #tpu.memory_space<semaphore_mem>>
      %258 = tpu.memref_squeeze %257 : memref<1x!tpu.dma_semaphore, #tpu.memory_space<semaphore_mem>> -> memref<!tpu.dma_semaphore, #tpu.memory_space<semaphore_mem>>
      tpu.enqueue_dma source(%254 : memref<32x128xf32, #tpu.memory_space<any>>) target(%256 : memref<32x128xf32, #tpu.memory_space<vmem>>) target_semaphore(%258 : memref<!tpu.dma_semaphore, #tpu.memory_space<semaphore_mem>>)
    } else {
    }
    %c16_i32 = arith.constant 16 : i32
    %8 = arith.muli %arg1, %c16_i32 : i32
    %c0_i32_2 = arith.constant 0 : i32
    %9 = tpu.memref_slice %arg2[%arg0, %8, %c0_i32_2] : memref<2x72x128xf32, #tpu.memory_space<any>> -> memref<1x32x128xf32, #tpu.memory_space<any>>
    %10 = tpu.memref_squeeze %9 : memref<1x32x128xf32, #tpu.memory_space<any>> -> memref<32x128xf32, #tpu.memory_space<any>>
    %c0_i32_3 = arith.constant 0 : i32
    %c0_i32_4 = arith.constant 0 : i32
    %11 = tpu.memref_slice %arg14[%0, %c0_i32_3, %c0_i32_4] : memref<2x32x128xf32, #tpu.memory_space<vmem>> -> memref<1x32x128xf32, #tpu.memory_space<vmem>>
    %12 = tpu.memref_squeeze %11 : memref<1x32x128xf32, #tpu.memory_space<vmem>> -> memref<32x128xf32, #tpu.memory_space<vmem>>
    %13 = tpu.memref_slice %arg15[%0] : memref<2x!tpu.dma_semaphore, #tpu.memory_space<semaphore_mem>> -> memref<1x!tpu.dma_semaphore, #tpu.memory_space<semaphore_mem>>
    %14 = tpu.memref_squeeze %13 : memref<1x!tpu.dma_semaphore, #tpu.memory_space<semaphore_mem>> -> memref<!tpu.dma_semaphore, #tpu.memory_space<semaphore_mem>>
    tpu.wait_dma2 semaphore(%14 : memref<!tpu.dma_semaphore, #tpu.memory_space<semaphore_mem>>) src(%10 : memref<32x128xf32, #tpu.memory_space<any>>) dst(%12 : memref<32x128xf32, #tpu.memory_space<vmem>>)
    %15 = arith.index_cast %0 : i32 to index
    %c0 = arith.constant 0 : index
    %c0_5 = arith.constant 0 : index
    %16 = vector.load %arg14[%15, %c0, %c0_5] : memref<2x32x128xf32, #tpu.memory_space<vmem>>, vector<1x32x128xf32>
    %17 = vector.shape_cast %16 : vector<1x32x128xf32> to vector<32x128xf32>
    %c0_6 = arith.constant 0 : index
    %c0_7 = arith.constant 0 : index
    %18 = vector.load %arg3[%c0_6, %c0_7] : memref<1x128xf32, #tpu.memory_space<vmem>>, vector<1x128xf32>
    %19 = vector.shape_cast %18 : vector<1x128xf32> to vector<128xf32>
    %c0_8 = arith.constant 0 : index
    %c0_9 = arith.constant 0 : index
    %20 = vector.load %arg4[%c0_8, %c0_9] : memref<1x128xf32, #tpu.memory_space<vmem>>, vector<1x128xf32>
    %21 = vector.shape_cast %20 : vector<1x128xf32> to vector<128xf32>
    %cst = arith.constant dense<0.000000e+00> : vector<32xf32>
    %22 = vector.multi_reduction <add>, %17, %cst [1] : vector<32x128xf32> to vector<32xf32>
    %23 = vector.shape_cast %22 : vector<32xf32> to vector<32x1xf32>
    %cst_10 = arith.constant 3.125000e-02 : f32
    %24 = vector.broadcast %cst_10 : f32 to vector<32x1xf32>
    %25 = arith.mulf %23, %24 : vector<32x1xf32>
    %26 = arith.mulf %17, %17 : vector<32x128xf32>
    %cst_11 = arith.constant dense<0.000000e+00> : vector<32xf32>
    %27 = vector.multi_reduction <add>, %26, %cst_11 [1] : vector<32x128xf32> to vector<32xf32>
    %28 = vector.shape_cast %27 : vector<32xf32> to vector<32x1xf32>
    %cst_12 = arith.constant 3.125000e-02 : f32
    %29 = vector.broadcast %cst_12 : f32 to vector<32x1xf32>
    %30 = arith.mulf %28, %29 : vector<32x1xf32>
    %31 = arith.mulf %25, %25 : vector<32x1xf32>
    %32 = arith.subf %30, %31 : vector<32x1xf32>
    %cst_13 = arith.constant 0.000000e+00 : f32
    %33 = vector.broadcast %cst_13 : f32 to vector<32x1xf32>
    %34 = arith.maximumf %32, %33 : vector<32x1xf32>
    %35 = vector.broadcast %25 : vector<32x1xf32> to vector<32x128xf32>
    %36 = arith.subf %17, %35 : vector<32x128xf32>
    %cst_14 = arith.constant 9.99999974E-6 : f32
    %37 = vector.broadcast %cst_14 : f32 to vector<32x1xf32>
    %38 = arith.addf %34, %37 : vector<32x1xf32>
    %39 = math.rsqrt %38 : vector<32x1xf32>
    %40 = vector.broadcast %39 : vector<32x1xf32> to vector<32x128xf32>
    %41 = arith.mulf %36, %40 : vector<32x128xf32>
    %42 = vector.shape_cast %19 : vector<128xf32> to vector<1x128xf32>
    %43 = vector.broadcast %42 : vector<1x128xf32> to vector<32x128xf32>
    %44 = arith.mulf %41, %43 : vector<32x128xf32>
    %45 = vector.shape_cast %21 : vector<128xf32> to vector<1x128xf32>
    %46 = vector.broadcast %45 : vector<1x128xf32> to vector<32x128xf32>
    %47 = arith.addf %44, %46 : vector<32x128xf32>
    %48 = arith.truncf %47 : vector<32x128xf32> to vector<32x128xbf16>
    %c0_15 = arith.constant 0 : index
    %c0_16 = arith.constant 0 : index
    %49 = vector.load %arg5[%c0_15, %c0_16] : memref<128x256xbf16, #tpu.memory_space<vmem>>, vector<128x256xbf16>
    %cst_17 = arith.constant dense<0.000000e+00> : vector<32x256xf32>
    %50 = tpu.matmul %48, %49, %cst_17 {dimension_numbers = #tpu.dot_dimension_numbers<[1], [0], [0], [1], [0, 0, 1, 1], [], []>} : vector<32x128xbf16>, vector<128x256xbf16>, vector<32x256xf32> -> vector<32x256xf32>
    %c0_18 = arith.constant 0 : index
    %c0_19 = arith.constant 0 : index
    %51 = vector.load %arg6[%c0_18, %c0_19] : memref<1x256xf32, #tpu.memory_space<vmem>>, vector<1x256xf32>
    %52 = vector.shape_cast %51 : vector<1x256xf32> to vector<256xf32>
    %53 = vector.shape_cast %52 : vector<256xf32> to vector<1x256xf32>
    %54 = vector.broadcast %53 : vector<1x256xf32> to vector<32x256xf32>
    %55 = arith.addf %50, %54 : vector<32x256xf32>
    %56 = vector.extract_strided_slice %55 {offsets = [0, 0], sizes = [32, 128], strides = [1, 1]} : vector<32x256xf32> to vector<32x128xf32>
    %57 = vector.extract_strided_slice %55 {offsets = [0, 128], sizes = [32, 128], strides = [1, 1]} : vector<32x256xf32> to vector<32x128xf32>
    %58 = arith.negf %57 : vector<32x128xf32>
    %59 = math.exp %58 : vector<32x128xf32>
    %cst_20 = arith.constant 1.000000e+00 : f32
    %60 = vector.broadcast %cst_20 : f32 to vector<32x128xf32>
    %61 = arith.addf %60, %59 : vector<32x128xf32>
    %62 = arith.divf %60, %61 : vector<32x128xf32>
    %63 = arith.mulf %56, %62 : vector<32x128xf32>
    %64 = tpu.iota {dimensions = array<i32: 0>} : vector<32x1xi32>
    %c16_i32_21 = arith.constant 16 : i32
    %65 = arith.muli %arg1, %c16_i32_21 : i32
    %c7_i32 = arith.constant 7 : i32
    %66 = arith.subi %65, %c7_i32 : i32
    %67 = vector.broadcast %66 : i32 to vector<32x1xi32>
    %68 = arith.addi %64, %67 : vector<32x1xi32>
    %c0_i32_22 = arith.constant 0 : i32
    %69 = vector.broadcast %c0_i32_22 : i32 to vector<32x1xi32>
    %70 = arith.cmpi sge, %68, %69 : vector<32x1xi32>
    %c40_i32 = arith.constant 40 : i32
    %71 = vector.broadcast %c40_i32 : i32 to vector<32x1xi32>
    %72 = arith.cmpi slt, %68, %71 : vector<32x1xi32>
    %73 = arith.andi %70, %72 : vector<32x1xi1>
    %cst_23 = arith.constant 0.000000e+00 : f32
    %74 = vector.shape_cast %73 : vector<32x1xi1> to vector<32x1xi1>
    %75 = vector.broadcast %74 : vector<32x1xi1> to vector<32x128xi1>
    %76 = vector.broadcast %cst_23 : f32 to vector<32x128xf32>
    %77 = arith.select %75, %63, %76 : vector<32x128xi1>, vector<32x128xf32>
    %78 = arith.truncf %77 : vector<32x128xf32> to vector<32x128xbf16>
    %c0_24 = arith.constant 0 : index
    %c0_25 = arith.constant 0 : index
    %79 = vector.load %arg16[%c0_24, %c0_25] : memref<32x128xbf16, #tpu.memory_space<vmem>>, vector<32x128xbf16>
    tpu.vector_store %arg16[%c0_24, %c0_25], %78 {strides = array<i32>} : memref<32x128xbf16, #tpu.memory_space<vmem>>, vector<32x128xbf16>,
    %c0_26 = arith.constant 0 : index
    %c0_27 = arith.constant 0 : index
    %80 = vector.load %arg7[%c0_26, %c0_27] : memref<15x128xbf16, #tpu.memory_space<vmem>>, vector<15x128xbf16>
    %c0_28 = arith.constant 0 : index
    %c0_29 = arith.constant 0 : index
    %81 = vector.load %arg8[%c0_28, %c0_29] : memref<1x128xf32, #tpu.memory_space<vmem>>, vector<1x128xf32>
    %c0_30 = arith.constant 0 : index
    %c0_31 = arith.constant 0 : index
    %82 = vector.load %arg16[%c0_30, %c0_31] : memref<32x128xbf16, #tpu.memory_space<vmem>>, vector<16x128xbf16>
    %83 = vector.extract_strided_slice %80 {offsets = [0, 0], sizes = [1, 128], strides = [1, 1]} : vector<15x128xbf16> to vector<1x128xbf16>
    %84 = vector.shape_cast %83 : vector<1x128xbf16> to vector<128xbf16>
    %85 = vector.shape_cast %84 : vector<128xbf16> to vector<1x128xbf16>
    %86 = vector.broadcast %85 : vector<1x128xbf16> to vector<16x128xbf16>
    %87 = arith.mulf %82, %86 : vector<16x128xbf16>
    %88 = arith.extf %87 : vector<16x128xbf16> to vector<16x128xf32>
    %89 = vector.broadcast %81 : vector<1x128xf32> to vector<16x128xf32>
    %90 = arith.addf %89, %88 : vector<16x128xf32>
    %c1 = arith.constant 1 : index
    %c0_32 = arith.constant 0 : index
    %91 = vector.load %arg16[%c1, %c0_32] : memref<32x128xbf16, #tpu.memory_space<vmem>>, vector<16x128xbf16>
    %92 = vector.extract_strided_slice %80 {offsets = [1, 0], sizes = [1, 128], strides = [1, 1]} : vector<15x128xbf16> to vector<1x128xbf16>
    %93 = vector.shape_cast %92 : vector<1x128xbf16> to vector<128xbf16>
    %94 = vector.shape_cast %93 : vector<128xbf16> to vector<1x128xbf16>
    %95 = vector.broadcast %94 : vector<1x128xbf16> to vector<16x128xbf16>
    %96 = arith.mulf %91, %95 : vector<16x128xbf16>
    %97 = arith.extf %96 : vector<16x128xbf16> to vector<16x128xf32>
    %98 = arith.addf %90, %97 : vector<16x128xf32>
    %c2 = arith.constant 2 : index
    %c0_33 = arith.constant 0 : index
    %99 = vector.load %arg16[%c2, %c0_33] : memref<32x128xbf16, #tpu.memory_space<vmem>>, vector<16x128xbf16>
    %100 = vector.extract_strided_slice %80 {offsets = [2, 0], sizes = [1, 128], strides = [1, 1]} : vector<15x128xbf16> to vector<1x128xbf16>
    %101 = vector.shape_cast %100 : vector<1x128xbf16> to vector<128xbf16>
    %102 = vector.shape_cast %101 : vector<128xbf16> to vector<1x128xbf16>
    %103 = vector.broadcast %102 : vector<1x128xbf16> to vector<16x128xbf16>
    %104 = arith.mulf %99, %103 : vector<16x128xbf16>
    %105 = arith.extf %104 : vector<16x128xbf16> to vector<16x128xf32>
    %106 = arith.addf %98, %105 : vector<16x128xf32>
    %c3 = arith.constant 3 : index
    %c0_34 = arith.constant 0 : index
    %107 = vector.load %arg16[%c3, %c0_34] : memref<32x128xbf16, #tpu.memory_space<vmem>>, vector<16x128xbf16>
    %108 = vector.extract_strided_slice %80 {offsets = [3, 0], sizes = [1, 128], strides = [1, 1]} : vector<15x128xbf16> to vector<1x128xbf16>
    %109 = vector.shape_cast %108 : vector<1x128xbf16> to vector<128xbf16>
    %110 = vector.shape_cast %109 : vector<128xbf16> to vector<1x128xbf16>
    %111 = vector.broadcast %110 : vector<1x128xbf16> to vector<16x128xbf16>
    %112 = arith.mulf %107, %111 : vector<16x128xbf16>
    %113 = arith.extf %112 : vector<16x128xbf16> to vector<16x128xf32>
    %114 = arith.addf %106, %113 : vector<16x128xf32>
    %c4 = arith.constant 4 : index
    %c0_35 = arith.constant 0 : index
    %115 = vector.load %arg16[%c4, %c0_35] : memref<32x128xbf16, #tpu.memory_space<vmem>>, vector<16x128xbf16>
    %116 = vector.extract_strided_slice %80 {offsets = [4, 0], sizes = [1, 128], strides = [1, 1]} : vector<15x128xbf16> to vector<1x128xbf16>
    %117 = vector.shape_cast %116 : vector<1x128xbf16> to vector<128xbf16>
    %118 = vector.shape_cast %117 : vector<128xbf16> to vector<1x128xbf16>
    %119 = vector.broadcast %118 : vector<1x128xbf16> to vector<16x128xbf16>
    %120 = arith.mulf %115, %119 : vector<16x128xbf16>
    %121 = arith.extf %120 : vector<16x128xbf16> to vector<16x128xf32>
    %122 = arith.addf %114, %121 : vector<16x128xf32>
    %c5 = arith.constant 5 : index
    %c0_36 = arith.constant 0 : index
    %123 = vector.load %arg16[%c5, %c0_36] : memref<32x128xbf16, #tpu.memory_space<vmem>>, vector<16x128xbf16>
    %124 = vector.extract_strided_slice %80 {offsets = [5, 0], sizes = [1, 128], strides = [1, 1]} : vector<15x128xbf16> to vector<1x128xbf16>
    %125 = vector.shape_cast %124 : vector<1x128xbf16> to vector<128xbf16>
    %126 = vector.shape_cast %125 : vector<128xbf16> to vector<1x128xbf16>
    %127 = vector.broadcast %126 : vector<1x128xbf16> to vector<16x128xbf16>
    %128 = arith.mulf %123, %127 : vector<16x128xbf16>
    %129 = arith.extf %128 : vector<16x128xbf16> to vector<16x128xf32>
    %130 = arith.addf %122, %129 : vector<16x128xf32>
    %c6 = arith.constant 6 : index
    %c0_37 = arith.constant 0 : index
    %131 = vector.load %arg16[%c6, %c0_37] : memref<32x128xbf16, #tpu.memory_space<vmem>>, vector<16x128xbf16>
    %132 = vector.extract_strided_slice %80 {offsets = [6, 0], sizes = [1, 128], strides = [1, 1]} : vector<15x128xbf16> to vector<1x128xbf16>
    %133 = vector.shape_cast %132 : vector<1x128xbf16> to vector<128xbf16>
    %134 = vector.shape_cast %133 : vector<128xbf16> to vector<1x128xbf16>
    %135 = vector.broadcast %134 : vector<1x128xbf16> to vector<16x128xbf16>
    %136 = arith.mulf %131, %135 : vector<16x128xbf16>
    %137 = arith.extf %136 : vector<16x128xbf16> to vector<16x128xf32>
    %138 = arith.addf %130, %137 : vector<16x128xf32>
    %c7 = arith.constant 7 : index
    %c0_38 = arith.constant 0 : index
    %139 = vector.load %arg16[%c7, %c0_38] : memref<32x128xbf16, #tpu.memory_space<vmem>>, vector<16x128xbf16>
    %140 = vector.extract_strided_slice %80 {offsets = [7, 0], sizes = [1, 128], strides = [1, 1]} : vector<15x128xbf16> to vector<1x128xbf16>
    %141 = vector.shape_cast %140 : vector<1x128xbf16> to vector<128xbf16>
    %142 = vector.shape_cast %141 : vector<128xbf16> to vector<1x128xbf16>
    %143 = vector.broadcast %142 : vector<1x128xbf16> to vector<16x128xbf16>
    %144 = arith.mulf %139, %143 : vector<16x128xbf16>
    %145 = arith.extf %144 : vector<16x128xbf16> to vector<16x128xf32>
    %146 = arith.addf %138, %145 : vector<16x128xf32>
    %c8 = arith.constant 8 : index
    %c0_39 = arith.constant 0 : index
    %147 = vector.load %arg16[%c8, %c0_39] : memref<32x128xbf16, #tpu.memory_space<vmem>>, vector<16x128xbf16>
    %148 = vector.extract_strided_slice %80 {offsets = [8, 0], sizes = [1, 128], strides = [1, 1]} : vector<15x128xbf16> to vector<1x128xbf16>
    %149 = vector.shape_cast %148 : vector<1x128xbf16> to vector<128xbf16>
    %150 = vector.shape_cast %149 : vector<128xbf16> to vector<1x128xbf16>
    %151 = vector.broadcast %150 : vector<1x128xbf16> to vector<16x128xbf16>
    %152 = arith.mulf %147, %151 : vector<16x128xbf16>
    %153 = arith.extf %152 : vector<16x128xbf16> to vector<16x128xf32>
    %154 = arith.addf %146, %153 : vector<16x128xf32>
    %c9 = arith.constant 9 : index
    %c0_40 = arith.constant 0 : index
    %155 = vector.load %arg16[%c9, %c0_40] : memref<32x128xbf16, #tpu.memory_space<vmem>>, vector<16x128xbf16>
    %156 = vector.extract_strided_slice %80 {offsets = [9, 0], sizes = [1, 128], strides = [1, 1]} : vector<15x128xbf16> to vector<1x128xbf16>
    %157 = vector.shape_cast %156 : vector<1x128xbf16> to vector<128xbf16>
    %158 = vector.shape_cast %157 : vector<128xbf16> to vector<1x128xbf16>
    %159 = vector.broadcast %158 : vector<1x128xbf16> to vector<16x128xbf16>
    %160 = arith.mulf %155, %159 : vector<16x128xbf16>
    %161 = arith.extf %160 : vector<16x128xbf16> to vector<16x128xf32>
    %162 = arith.addf %154, %161 : vector<16x128xf32>
    %c10 = arith.constant 10 : index
    %c0_41 = arith.constant 0 : index
    %163 = vector.load %arg16[%c10, %c0_41] : memref<32x128xbf16, #tpu.memory_space<vmem>>, vector<16x128xbf16>
    %164 = vector.extract_strided_slice %80 {offsets = [10, 0], sizes = [1, 128], strides = [1, 1]} : vector<15x128xbf16> to vector<1x128xbf16>
    %165 = vector.shape_cast %164 : vector<1x128xbf16> to vector<128xbf16>
    %166 = vector.shape_cast %165 : vector<128xbf16> to vector<1x128xbf16>
    %167 = vector.broadcast %166 : vector<1x128xbf16> to vector<16x128xbf16>
    %168 = arith.mulf %163, %167 : vector<16x128xbf16>
    %169 = arith.extf %168 : vector<16x128xbf16> to vector<16x128xf32>
    %170 = arith.addf %162, %169 : vector<16x128xf32>
    %c11 = arith.constant 11 : index
    %c0_42 = arith.constant 0 : index
    %171 = vector.load %arg16[%c11, %c0_42] : memref<32x128xbf16, #tpu.memory_space<vmem>>, vector<16x128xbf16>
    %172 = vector.extract_strided_slice %80 {offsets = [11, 0], sizes = [1, 128], strides = [1, 1]} : vector<15x128xbf16> to vector<1x128xbf16>
    %173 = vector.shape_cast %172 : vector<1x128xbf16> to vector<128xbf16>
    %174 = vector.shape_cast %173 : vector<128xbf16> to vector<1x128xbf16>
    %175 = vector.broadcast %174 : vector<1x128xbf16> to vector<16x128xbf16>
    %176 = arith.mulf %171, %175 : vector<16x128xbf16>
    %177 = arith.extf %176 : vector<16x128xbf16> to vector<16x128xf32>
    %178 = arith.addf %170, %177 : vector<16x128xf32>
    %c12 = arith.constant 12 : index
    %c0_43 = arith.constant 0 : index
    %179 = vector.load %arg16[%c12, %c0_43] : memref<32x128xbf16, #tpu.memory_space<vmem>>, vector<16x128xbf16>
    %180 = vector.extract_strided_slice %80 {offsets = [12, 0], sizes = [1, 128], strides = [1, 1]} : vector<15x128xbf16> to vector<1x128xbf16>
    %181 = vector.shape_cast %180 : vector<1x128xbf16> to vector<128xbf16>
    %182 = vector.shape_cast %181 : vector<128xbf16> to vector<1x128xbf16>
    %183 = vector.broadcast %182 : vector<1x128xbf16> to vector<16x128xbf16>
    %184 = arith.mulf %179, %183 : vector<16x128xbf16>
    %185 = arith.extf %184 : vector<16x128xbf16> to vector<16x128xf32>
    %186 = arith.addf %178, %185 : vector<16x128xf32>
    %c13 = arith.constant 13 : index
    %c0_44 = arith.constant 0 : index
    %187 = vector.load %arg16[%c13, %c0_44] : memref<32x128xbf16, #tpu.memory_space<vmem>>, vector<16x128xbf16>
    %188 = vector.extract_strided_slice %80 {offsets = [13, 0], sizes = [1, 128], strides = [1, 1]} : vector<15x128xbf16> to vector<1x128xbf16>
    %189 = vector.shape_cast %188 : vector<1x128xbf16> to vector<128xbf16>
    %190 = vector.shape_cast %189 : vector<128xbf16> to vector<1x128xbf16>
    %191 = vector.broadcast %190 : vector<1x128xbf16> to vector<16x128xbf16>
    %192 = arith.mulf %187, %191 : vector<16x128xbf16>
    %193 = arith.extf %192 : vector<16x128xbf16> to vector<16x128xf32>
    %194 = arith.addf %186, %193 : vector<16x128xf32>
    %c14 = arith.constant 14 : index
    %c0_45 = arith.constant 0 : index
    %195 = vector.load %arg16[%c14, %c0_45] : memref<32x128xbf16, #tpu.memory_space<vmem>>, vector<16x128xbf16>
    %196 = vector.extract_strided_slice %80 {offsets = [14, 0], sizes = [1, 128], strides = [1, 1]} : vector<15x128xbf16> to vector<1x128xbf16>
    %197 = vector.shape_cast %196 : vector<1x128xbf16> to vector<128xbf16>
    %198 = vector.shape_cast %197 : vector<128xbf16> to vector<1x128xbf16>
    %199 = vector.broadcast %198 : vector<1x128xbf16> to vector<16x128xbf16>
    %200 = arith.mulf %195, %199 : vector<16x128xbf16>
    %201 = arith.extf %200 : vector<16x128xbf16> to vector<16x128xf32>
    %202 = arith.addf %194, %201 : vector<16x128xf32>
    %c0_46 = arith.constant 0 : index
    %c0_47 = arith.constant 0 : index
    %203 = vector.load %arg9[%c0_46, %c0_47] : memref<1x128xf32, #tpu.memory_space<vmem>>, vector<1x128xf32>
    %204 = vector.shape_cast %203 : vector<1x128xf32> to vector<128xf32>
    %c0_48 = arith.constant 0 : index
    %c0_49 = arith.constant 0 : index
    %205 = vector.load %arg10[%c0_48, %c0_49] : memref<1x128xf32, #tpu.memory_space<vmem>>, vector<1x128xf32>
    %206 = vector.shape_cast %205 : vector<1x128xf32> to vector<128xf32>
    %cst_50 = arith.constant dense<0.000000e+00> : vector<16xf32>
    %207 = vector.multi_reduction <add>, %202, %cst_50 [1] : vector<16x128xf32> to vector<16xf32>
    %208 = vector.shape_cast %207 : vector<16xf32> to vector<16x1xf32>
    %cst_51 = arith.constant 3.125000e-02 : f32
    %209 = vector.broadcast %cst_51 : f32 to vector<16x1xf32>
    %210 = arith.mulf %208, %209 : vector<16x1xf32>
    %211 = arith.mulf %202, %202 : vector<16x128xf32>
    %cst_52 = arith.constant dense<0.000000e+00> : vector<16xf32>
    %212 = vector.multi_reduction <add>, %211, %cst_52 [1] : vector<16x128xf32> to vector<16xf32>
    %213 = vector.shape_cast %212 : vector<16xf32> to vector<16x1xf32>
    %cst_53 = arith.constant 3.125000e-02 : f32
    %214 = vector.broadcast %cst_53 : f32 to vector<16x1xf32>
    %215 = arith.mulf %213, %214 : vector<16x1xf32>
    %216 = arith.mulf %210, %210 : vector<16x1xf32>
    %217 = arith.subf %215, %216 : vector<16x1xf32>
    %cst_54 = arith.constant 0.000000e+00 : f32
    %218 = vector.broadcast %cst_54 : f32 to vector<16x1xf32>
    %219 = arith.maximumf %217, %218 : vector<16x1xf32>
    %220 = vector.broadcast %210 : vector<16x1xf32> to vector<16x128xf32>
    %221 = arith.subf %202, %220 : vector<16x128xf32>
    %cst_55 = arith.constant 9.99999974E-6 : f32
    %222 = vector.broadcast %cst_55 : f32 to vector<16x1xf32>
    %223 = arith.addf %219, %222 : vector<16x1xf32>
    %224 = math.rsqrt %223 : vector<16x1xf32>
    %225 = vector.broadcast %224 : vector<16x1xf32> to vector<16x128xf32>
    %226 = arith.mulf %221, %225 : vector<16x128xf32>
    %227 = vector.shape_cast %204 : vector<128xf32> to vector<1x128xf32>
    %228 = vector.broadcast %227 : vector<1x128xf32> to vector<16x128xf32>
    %229 = arith.mulf %226, %228 : vector<16x128xf32>
    %230 = vector.shape_cast %206 : vector<128xf32> to vector<1x128xf32>
    %231 = vector.broadcast %230 : vector<1x128xf32> to vector<16x128xf32>
    %232 = arith.addf %229, %231 : vector<16x128xf32>
    %233 = arith.negf %232 : vector<16x128xf32>
    %234 = math.exp %233 : vector<16x128xf32>
    %cst_56 = arith.constant 1.000000e+00 : f32
    %235 = vector.broadcast %cst_56 : f32 to vector<16x128xf32>
    %236 = arith.addf %235, %234 : vector<16x128xf32>
    %237 = arith.divf %235, %236 : vector<16x128xf32>
    %238 = arith.mulf %232, %237 : vector<16x128xf32>
    %239 = arith.truncf %238 : vector<16x128xf32> to vector<16x128xbf16>
    %c0_57 = arith.constant 0 : index
    %c0_58 = arith.constant 0 : index
    %240 = vector.load %arg11[%c0_57, %c0_58] : memref<128x128xbf16, #tpu.memory_space<vmem>>, vector<128x128xbf16>
    %cst_59 = arith.constant dense<0.000000e+00> : vector<16x128xf32>
    %241 = tpu.matmul %239, %240, %cst_59 {dimension_numbers = #tpu.dot_dimension_numbers<[1], [0], [0], [1], [0, 0, 1, 1], [], []>} : vector<16x128xbf16>, vector<128x128xbf16>, vector<16x128xf32> -> vector<16x128xf32>
    %c0_60 = arith.constant 0 : index
    %c0_61 = arith.constant 0 : index
    %242 = vector.load %arg12[%c0_60, %c0_61] : memref<1x128xf32, #tpu.memory_space<vmem>>, vector<1x128xf32>
    %243 = vector.shape_cast %242 : vector<1x128xf32> to vector<128xf32>
    %244 = vector.shape_cast %243 : vector<128xf32> to vector<1x128xf32>
    %245 = vector.broadcast %244 : vector<1x128xf32> to vector<16x128xf32>
    %246 = arith.addf %241, %245 : vector<16x128xf32>
    %c0_62 = arith.constant 0 : index
    %c0_63 = arith.constant 0 : index
    %c0_64 = arith.constant 0 : index
    %247 = vector.load %arg13[%c0_62, %c0_63, %c0_64] : memref<1x16x128xf32, #tpu.memory_space<vmem>>, vector<1x16x128xf32>
    %248 = vector.shape_cast %247 : vector<1x16x128xf32> to vector<16x128xf32>
    %249 = vector.shape_cast %246 : vector<16x128xf32> to vector<1x16x128xf32>
    tpu.vector_store %arg13[%c0_62, %c0_63, %c0_64], %249 {strides = array<i32>} : memref<1x16x128xf32, #tpu.memory_space<vmem>>, vector<1x16x128xf32>,
    return
  }
  func.func @transform_1(%arg0: i32, %arg1: i32) -> (i32, i32) {
    %c0_i32 = arith.constant 0 : i32
    %c0_i32_0 = arith.constant 0 : i32
    %c0_i32_1 = arith.constant 0 : i32
    return %c0_i32, %c0_i32_0 : i32, i32
  }
  func.func @transform_2(%arg0: i32, %arg1: i32) -> (i32, i32) {
    %c0_i32 = arith.constant 0 : i32
    %c0_i32_0 = arith.constant 0 : i32
    %c0_i32_1 = arith.constant 0 : i32
    return %c0_i32, %c0_i32_0 : i32, i32
  }
  func.func @transform_3(%arg0: i32, %arg1: i32) -> (i32, i32) {
    %c0_i32 = arith.constant 0 : i32
    %c0_i32_0 = arith.constant 0 : i32
    %c0_i32_1 = arith.constant 0 : i32
    return %c0_i32, %c0_i32_0 : i32, i32
  }
  func.func @transform_4(%arg0: i32, %arg1: i32) -> (i32, i32) {
    %c0_i32 = arith.constant 0 : i32
    %c0_i32_0 = arith.constant 0 : i32
    %c0_i32_1 = arith.constant 0 : i32
    return %c0_i32, %c0_i32_0 : i32, i32
  }
  func.func @transform_5(%arg0: i32, %arg1: i32) -> (i32, i32) {
    %c0_i32 = arith.constant 0 : i32
    %c0_i32_0 = arith.constant 0 : i32
    %c0_i32_1 = arith.constant 0 : i32
    return %c0_i32, %c0_i32_0 : i32, i32
  }
  func.func @transform_6(%arg0: i32, %arg1: i32) -> (i32, i32) {
    %c0_i32 = arith.constant 0 : i32
    %c0_i32_0 = arith.constant 0 : i32
    %c0_i32_1 = arith.constant 0 : i32
    return %c0_i32, %c0_i32_0 : i32, i32
  }
  func.func @transform_7(%arg0: i32, %arg1: i32) -> (i32, i32) {
    %c0_i32 = arith.constant 0 : i32
    %c0_i32_0 = arith.constant 0 : i32
    %c0_i32_1 = arith.constant 0 : i32
    return %c0_i32, %c0_i32_0 : i32, i32
  }
  func.func @transform_8(%arg0: i32, %arg1: i32) -> (i32, i32) {
    %c0_i32 = arith.constant 0 : i32
    %c0_i32_0 = arith.constant 0 : i32
    %c0_i32_1 = arith.constant 0 : i32
    return %c0_i32, %c0_i32_0 : i32, i32
  }
  func.func @transform_9(%arg0: i32, %arg1: i32) -> (i32, i32) {
    %c0_i32 = arith.constant 0 : i32
    %c0_i32_0 = arith.constant 0 : i32
    %c0_i32_1 = arith.constant 0 : i32
    return %c0_i32, %c0_i32_0 : i32, i32
  }
  func.func @transform_10(%arg0: i32, %arg1: i32) -> (i32, i32) {
    %c0_i32 = arith.constant 0 : i32
    %c0_i32_0 = arith.constant 0 : i32
    %c0_i32_1 = arith.constant 0 : i32
    return %c0_i32, %c0_i32_0 : i32, i32
  }
  func.func @transform_11(%arg0: i32, %arg1: i32) -> (i32, i32, i32) {
    %c0_i32 = arith.constant 0 : i32
    %c0_i32_0 = arith.constant 0 : i32
    return %arg0, %arg1, %c0_i32 : i32, i32, i32
  }
}

</mosaic_0001>

<llo_original>
// kernel: tpu_custom_call.1
$region0: #{tpu_custom_call.1}
  #allocation0 [shape = 'u32[]', space=smem, size = 0x4, offset = 0x4, fixed_abs, tag = 'smem constant byte address 0x4 - core index']
  #allocation1 [shape = 'u32[72,128]{1,0:T(1,128)}', space=vmem, size = 0x9000, scoped, tag = 'internal scratch']
  #allocation2 [shape = 'f32[2,32,128]{2,1,0:T(8,128)}', space=vmem, size = 0x8000, scoped, tag = 'scratch operand']
  #allocation3 [shape = 's32[2]{0}', space=sflag, size = 0x8, scoped, tag = 'scratch operand']
  #allocation4 [shape = 'bf16[32,128]{1,0:T(8,128)(2,1)}', space=vmem, size = 0x2000, scoped, tag = 'scratch operand']
  #allocation14 [shape = 's32[]', space=sflag, size = 0x4, offset = 0, fixed_abs, tag = 'sflag constant byte address 0x0 - dummy sync flag']
  #allocation15 [shape = 's32[]', space=sflag, size = 0x4, offset = 0, fixed_abs, tag = 'sflag constant byte address 0x0 - dummy sync flag']
  #allocation16 [shape = 'u32[]', space=smem, size = 0x4, offset = 0x44, fixed_abs, tag = 'smem constant byte address 0x44 - assertion arg 0']
  #allocation17 [shape = 'u32[]', space=smem, size = 0x4, offset = 0x48, fixed_abs, tag = 'smem constant byte address 0x48 - assertion arg 1']
  #allocation18 [shape = 's32[]', space=sflag, size = 0x4, offset = 0, fixed_abs, tag = 'sflag constant byte address 0x0 - dummy sync flag']
  #allocation19 [shape = 's32[]', space=sflag, size = 0x4, offset = 0, fixed_abs, tag = 'sflag constant byte address 0x0 - dummy sync flag']
  %s0 = inlined_call_operand.hbm [shape: f32[2,72,128], index: 0, kind: input, shape index: {}]
  %s1 = inlined_call_operand.hbm [shape: f32[1,128], index: 1, kind: input, shape index: {}]
  %s2 = inlined_call_operand.vmem [shape: f32[1,128], index: 2, kind: input, shape index: {}]
  %s3 = inlined_call_operand.hbm [shape: bf16[128,256], index: 3, kind: input, shape index: {}]
  %s4 = inlined_call_operand.vmem [shape: f32[1,256], index: 4, kind: input, shape index: {}]
  %s5 = inlined_call_operand.hbm [shape: bf16[15,128], index: 5, kind: input, shape index: {}]
  %s6 = inlined_call_operand.vmem [shape: f32[1,128], index: 6, kind: input, shape index: {}]
  %s7 = inlined_call_operand.vmem [shape: f32[1,128], index: 7, kind: input, shape index: {}]
  %s8 = inlined_call_operand.vmem [shape: f32[1,128], index: 8, kind: input, shape index: {}]
  %s9 = inlined_call_operand.hbm [shape: bf16[128,128], index: 9, kind: input, shape index: {}]
  %s10 = inlined_call_operand.vmem [shape: f32[1,128], index: 10, kind: input, shape index: {}]
  %s11 = inlined_call_operand.hbm [shape: f32[2,48,128], index: 11, kind: output, shape index: {}]
  %s12 = sld [smem:[#allocation0]]
  $region105: #{tpu_custom_call.1} parent=0
    _
  %s14 = ssub.s32 1, %s12
  %s15 = scalar_select 0, %s14, %s12
  $region1: #{tpu_custom_call.1} parent=0
    #allocation5 [shape = 'u8[512]{0}', space=vmem, size = 0x400, scoped, tag = 'input window, operand 1, single buffered']
    #allocation6 [shape = 's32[2]{0}', space=sflag, size = 0x8, scoped, tag = 'scoped memory for tpu_custom_call.1']
    #allocation7 [shape = 's32[2]{0}', space=sflag, size = 0x8, scoped, tag = 'scoped memory for tpu_custom_call.1']
    #allocation8 [shape = 'u8[65536]{0}', space=vmem, size = 0x10000, scoped, tag = 'input window, operand 3, single buffered']
    #allocation9 [shape = 's32[1]{0}', space=sflag, size = 0x4, scoped, tag = 'scoped memory for tpu_custom_call.1']
    #allocation10 [shape = 'u8[4096]{0}', space=vmem, size = 0x1000, scoped, tag = 'input window, operand 5, single buffered']
    #allocation11 [shape = 'u8[32768]{0}', space=vmem, size = 0x8000, scoped, tag = 'input window, operand 9, single buffered']
    #allocation12 [shape = 's32[1]{0}', space=sflag, size = 0x4, scoped, tag = 'scoped memory for tpu_custom_call.1']
    #allocation13 [shape = 'u8[16384]{0}', space=vmem, size = 0x4000, scoped, tag = 'output window, operand 0']
    %16 = vsyncpa [#allocation6], 0
    %17 = vsyncpa [#allocation9], 0
    %18 = vsyncpa [#allocation12], 0
    %19 = vsyncpa [#allocation7], 0
    %s20 = scalar_lea.sflag [#allocation7], 1
    %21 = vsyncpa %s20, 0
    loop: start=0, step=1, limit=8
    $region2: #{tpu_custom_call.1} parent=1 // loop_pre_header
      _
    $region3: #{tpu_custom_call.1} parent=1 // loop_header
      %s23 = sphi 0, %s27
      %p24 = scmp.ge.s32.totalorder %s23, 8
      %s30 = sphi 0, %s42
      %s31 = sphi 0, %s38
      %s32 = sphi 0, %s30
      %s33 = sphi 0, %s31
      %s34 = sphi 0, %s32
      %s35 = sphi 0, %s33
      %s43 = sphi 0, %s43
      %s45 = sphi 0, %s43
      %s46 = sphi 0, %s45
      %s60 = sphi 0, %s46
      %s64 = sphi 0, %s64
      %s66 = sphi 0, %s64
      %s67 = sphi 0, %s66
      %s81 = sphi 0, %s67
      %s85 = sphi 0, %s85
      %s87 = sphi 0, %s85
      %s88 = sphi 0, %s87
      %s102 = sphi 0, %s88
      %s106 = sphi 0, %s106
      %s108 = sphi 0, %s106
      %s109 = sphi 0, %s108
      %s123 = sphi 0, %s109
      %s127 = sphi 0, %s127
      %s129 = sphi 0, %s127
      %s130 = sphi 0, %s129
      %s144 = sphi 0, %s130
      %s148 = sphi 0, %s148
      %s150 = sphi 0, %s148
      %s151 = sphi 0, %s150
      %s165 = sphi 0, %s151
      %s169 = sphi 0, %s169
      %s171 = sphi 0, %s169
      %s172 = sphi 0, %s171
      %s186 = sphi 0, %s172
      %s190 = sphi 0, %s190
      %s192 = sphi 0, %s190
      %s193 = sphi 0, %s192
      %s207 = sphi 0, %s193
      %s211 = sphi 0, %s211
      %s213 = sphi 0, %s211
      %s214 = sphi 0, %s213
      %s228 = sphi 0, %s214
      %s232 = sphi 0, %s232
      %s234 = sphi 0, %s232
      %s235 = sphi 0, %s234
      %s249 = sphi 0, %s235
      %s257 = sphi 0, %s259
      %s260 = sphi 0, %s257
      %s261 = sphi 0, %s260
      %s277 = sphi 0, %s261
    $region4: #{tpu_custom_call.1} parent=1 // loop_header_branch
      %26 = sbr.rel (%p24) target = $region8
    $region5: #{tpu_custom_call.1} parent=1 // loop_body
      %s28 = ssub.s32 %s23, 1
      %s29 = ssub.s32 %s23, 2
      %s36 = sadd.s32 1, %s31
      %p37 = scmp.ge.s32.totalorder %s36, 3
      %s38 = scalar_select %p37, 0, %s36
      %s39 = sadd.s32 1, %s30
      %s40 = scalar_select %p37, %s39, %s30
      %p41 = scmp.ge.s32.totalorder %s40, 2
      %s42 = scalar_select %p41, 0, %s40
      %s44 = sadd.s32 %s43, 1
      %p47 = scmp.eq.s32.totalorder %s23, 5
      %p48 = scmp.ne.s32.totalorder %s43, %s45
      %p49 = scmp.eq.s32.totalorder %s23, 0
      %p50 = por %p48, %p49
      %p51 = scmp.ne.s32.totalorder %s43, %s45
      %p52 = scmp.eq.s32.totalorder %s28, 5
      %p53 = por %p51, %p52
      %p54 = scmp.ne.s32.totalorder %s45, %s46
      %p55 = scmp.eq.s32.totalorder %s28, 0
      %p56 = por %p54, %p55
      %p57 = scmp.ne.s32.totalorder %s45, %s46
      %p58 = scmp.eq.s32.totalorder %s29, 5
      %p59 = por %p57, %p58
      %p61 = scmp.ne.s32.totalorder %s46, %s60
      %p62 = scmp.eq.s32.totalorder %s29, 0
      %p63 = por %p61, %p62
      %s65 = sadd.s32 %s64, 1
      %p68 = scmp.eq.s32.totalorder %s23, 5
      %p69 = scmp.ne.s32.totalorder %s64, %s66
      %p70 = scmp.eq.s32.totalorder %s23, 0
      %p71 = por %p69, %p70
      %p72 = scmp.ne.s32.totalorder %s64, %s66
      %p73 = scmp.eq.s32.totalorder %s28, 5
      %p74 = por %p72, %p73
      %p75 = scmp.ne.s32.totalorder %s66, %s67
      %p76 = scmp.eq.s32.totalorder %s28, 0
      %p77 = por %p75, %p76
      %p78 = scmp.ne.s32.totalorder %s66, %s67
      %p79 = scmp.eq.s32.totalorder %s29, 5
      %p80 = por %p78, %p79
      %p82 = scmp.ne.s32.totalorder %s67, %s81
      %p83 = scmp.eq.s32.totalorder %s29, 0
      %p84 = por %p82, %p83
      %s86 = sadd.s32 %s85, 1
      %p89 = scmp.eq.s32.totalorder %s23, 5
      %p90 = scmp.ne.s32.totalorder %s85, %s87
      %p91 = scmp.eq.s32.totalorder %s23, 0
      %p92 = por %p90, %p91
      %p93 = scmp.ne.s32.totalorder %s85, %s87
      %p94 = scmp.eq.s32.totalorder %s28, 5
      %p95 = por %p93, %p94
      %p96 = scmp.ne.s32.totalorder %s87, %s88
      %p97 = scmp.eq.s32.totalorder %s28, 0
      %p98 = por %p96, %p97
      %p99 = scmp.ne.s32.totalorder %s87, %s88
      %p100 = scmp.eq.s32.totalorder %s29, 5
      %p101 = por %p99, %p100
      %p103 = scmp.ne.s32.totalorder %s88, %s102
      %p104 = scmp.eq.s32.totalorder %s29, 0
      %p105 = por %p103, %p104
      %s107 = sadd.s32 %s106, 1
      %p110 = scmp.eq.s32.totalorder %s23, 5
      %p111 = scmp.ne.s32.totalorder %s106, %s108
      %p112 = scmp.eq.s32.totalorder %s23, 0
      %p113 = por %p111, %p112
      %p114 = scmp.ne.s32.totalorder %s106, %s108
      %p115 = scmp.eq.s32.totalorder %s28, 5
      %p116 = por %p114, %p115
      %p117 = scmp.ne.s32.totalorder %s108, %s109
      %p118 = scmp.eq.s32.totalorder %s28, 0
      %p119 = por %p117, %p118
      %p120 = scmp.ne.s32.totalorder %s108, %s109
      %p121 = scmp.eq.s32.totalorder %s29, 5
      %p122 = por %p120, %p121
      %p124 = scmp.ne.s32.totalorder %s109, %s123
      %p125 = scmp.eq.s32.totalorder %s29, 0
      %p126 = por %p124, %p125
      %s128 = sadd.s32 %s127, 1
      %p131 = scmp.eq.s32.totalorder %s23, 5
      %p132 = scmp.ne.s32.totalorder %s127, %s129
      %p133 = scmp.eq.s32.totalorder %s23, 0
      %p134 = por %p132, %p133
      %p135 = scmp.ne.s32.totalorder %s127, %s129
      %p136 = scmp.eq.s32.totalorder %s28, 5
      %p137 = por %p135, %p136
      %p138 = scmp.ne.s32.totalorder %s129, %s130
      %p139 = scmp.eq.s32.totalorder %s28, 0
      %p140 = por %p138, %p139
      %p141 = scmp.ne.s32.totalorder %s129, %s130
      %p142 = scmp.eq.s32.totalorder %s29, 5
      %p143 = por %p141, %p142
      %p145 = scmp.ne.s32.totalorder %s130, %s144
      %p146 = scmp.eq.s32.totalorder %s29, 0
      %p147 = por %p145, %p146
      %s149 = sadd.s32 %s148, 1
      %p152 = scmp.eq.s32.totalorder %s23, 5
      %p153 = scmp.ne.s32.totalorder %s148, %s150
      %p154 = scmp.eq.s32.totalorder %s23, 0
      %p155 = por %p153, %p154
      %p156 = scmp.ne.s32.totalorder %s148, %s150
      %p157 = scmp.eq.s32.totalorder %s28, 5
      %p158 = por %p156, %p157
      %p159 = scmp.ne.s32.totalorder %s150, %s151
      %p160 = scmp.eq.s32.totalorder %s28, 0
      %p161 = por %p159, %p160
      %p162 = scmp.ne.s32.totalorder %s150, %s151
      %p163 = scmp.eq.s32.totalorder %s29, 5
      %p164 = por %p162, %p163
      %p166 = scmp.ne.s32.totalorder %s151, %s165
      %p167 = scmp.eq.s32.totalorder %s29, 0
      %p168 = por %p166, %p167
      %s170 = sadd.s32 %s169, 1
      %p173 = scmp.eq.s32.totalorder %s23, 5
      %p174 = scmp.ne.s32.totalorder %s169, %s171
      %p175 = scmp.eq.s32.totalorder %s23, 0
      %p176 = por %p174, %p175
      %p177 = scmp.ne.s32.totalorder %s169, %s171
      %p178 = scmp.eq.s32.totalorder %s28, 5
      %p179 = por %p177, %p178
      %p180 = scmp.ne.s32.totalorder %s171, %s172
      %p181 = scmp.eq.s32.totalorder %s28, 0
      %p182 = por %p180, %p181
      %p183 = scmp.ne.s32.totalorder %s171, %s172
      %p184 = scmp.eq.s32.totalorder %s29, 5
      %p185 = por %p183, %p184
      %p187 = scmp.ne.s32.totalorder %s172, %s186
      %p188 = scmp.eq.s32.totalorder %s29, 0
      %p189 = por %p187, %p188
      %s191 = sadd.s32 %s190, 1
      %p194 = scmp.eq.s32.totalorder %s23, 5
      %p195 = scmp.ne.s32.totalorder %s190, %s192
      %p196 = scmp.eq.s32.totalorder %s23, 0
      %p197 = por %p195, %p196
      %p198 = scmp.ne.s32.totalorder %s190, %s192
      %p199 = scmp.eq.s32.totalorder %s28, 5
      %p200 = por %p198, %p199
      %p201 = scmp.ne.s32.totalorder %s192, %s193
      %p202 = scmp.eq.s32.totalorder %s28, 0
      %p203 = por %p201, %p202
      %p204 = scmp.ne.s32.totalorder %s192, %s193
      %p205 = scmp.eq.s32.totalorder %s29, 5
      %p206 = por %p204, %p205
      %p208 = scmp.ne.s32.totalorder %s193, %s207
      %p209 = scmp.eq.s32.totalorder %s29, 0
      %p210 = por %p208, %p209
      %s212 = sadd.s32 %s211, 1
      %p215 = scmp.eq.s32.totalorder %s23, 5
      %p216 = scmp.ne.s32.totalorder %s211, %s213
      %p217 = scmp.eq.s32.totalorder %s23, 0
      %p218 = por %p216, %p217
      %p219 = scmp.ne.s32.totalorder %s211, %s213
      %p220 = scmp.eq.s32.totalorder %s28, 5
      %p221 = por %p219, %p220
      %p222 = scmp.ne.s32.totalorder %s213, %s214
      %p223 = scmp.eq.s32.totalorder %s28, 0
      %p224 = por %p222, %p223
      %p225 = scmp.ne.s32.totalorder %s213, %s214
      %p226 = scmp.eq.s32.totalorder %s29, 5
      %p227 = por %p225, %p226
      %p229 = scmp.ne.s32.totalorder %s214, %s228
      %p230 = scmp.eq.s32.totalorder %s29, 0
      %p231 = por %p229, %p230
      %s233 = sadd.s32 %s232, 1
      %p236 = scmp.eq.s32.totalorder %s23, 5
      %p237 = scmp.ne.s32.totalorder %s232, %s234
      %p238 = scmp.eq.s32.totalorder %s23, 0
      %p239 = por %p237, %p238
      %p240 = scmp.ne.s32.totalorder %s232, %s234
      %p241 = scmp.eq.s32.totalorder %s28, 5
      %p242 = por %p240, %p241
      %p243 = scmp.ne.s32.totalorder %s234, %s235
      %p244 = scmp.eq.s32.totalorder %s28, 0
      %p245 = por %p243, %p244
      %p246 = scmp.ne.s32.totalorder %s234, %s235
      %p247 = scmp.eq.s32.totalorder %s29, 5
      %p248 = por %p246, %p247
      %p250 = scmp.ne.s32.totalorder %s235, %s249
      %p251 = scmp.eq.s32.totalorder %s29, 0
      %p252 = por %p250, %p251
      %s253 = ssub.s32 %s30, %s42
      %s254 = ssub.s32 %s31, %s38
      %s255 = sor.u32 %s253, %s254
      %p256 = scmp.eq.s32.totalorder %s255, 0
      %s258 = sadd.s32 %s257, 1
      %s259 = scalar_select %p256, %s257, %s258
      %p262 = pneg %p256
      %p263 = scmp.eq.s32.totalorder %s23, 5
      %p264 = por %p262, %p263
      %p265 = scmp.ne.s32.totalorder %s257, %s260
      %p266 = scmp.eq.s32.totalorder %s23, 0
      %p267 = por %p265, %p266
      %p268 = scmp.ne.s32.totalorder %s257, %s260
      %p269 = scmp.eq.s32.totalorder %s28, 5
      %p270 = por %p268, %p269
      %p271 = scmp.ne.s32.totalorder %s260, %s261
      %p272 = scmp.eq.s32.totalorder %s28, 0
      %p273 = por %p271, %p272
      %p274 = scmp.ne.s32.totalorder %s260, %s261
      %p275 = scmp.eq.s32.totalorder %s29, 5
      %p276 = por %p274, %p275
      %p278 = scmp.ne.s32.totalorder %s261, %s277
      %p279 = scmp.eq.s32.totalorder %s29, 0
      %p280 = por %p278, %p279
      %p281 = scmp.le.s32.totalorder 1, %s23
      %p282 = scmp.lt.s32.totalorder %s23, 7
      %p283 = pnand %p281, %p282
      %p284 = pneg %p283
      // Predicated region
      $region9: #{tpu_custom_call.1} parent=5 // pred_check
        _
      $region10: #{tpu_custom_call.1} parent=5 // pred_check_branch
        %286 = sbr.rel (%p283) target = $region12
      $region11: #{tpu_custom_call.1} parent=5 // pred_region
        %s287 = ssub.s32 %s23, 1
        // Predicated region
        $region13: #{tpu_custom_call.1} parent=11 // pred_check
          %p288 = pneg %p56
        $region14: #{tpu_custom_call.1} parent=11 // pred_check_branch
          %290 = sbr.rel (%p288) target = $region16
        $region15: #{tpu_custom_call.1} parent=11 // pred_region
          %292 = vsyncadd [#allocation6], 0
          %s294 = sshll.u32 %s1, 4
          %s295 = int_to_ptr.hbm [resolvable:$true] %s294
          %s296 = sshll.u32 [#allocation5], 4
          %s297 = int_to_ptr.vmem [resolvable:$true] %s296
          %299 = dma.hbm_to_vmem [thread:$0]  %s295, 16, %s297, [#allocation6]
        $region16: #{tpu_custom_call.1} parent=11 // pred_fallthru
          _
        // Predicated region
        $region17: #{tpu_custom_call.1} parent=11 // pred_check
          %p300 = pneg %p77
        $region18: #{tpu_custom_call.1} parent=11 // pred_check_branch
          %302 = sbr.rel (%p300) target = $region20
        $region19: #{tpu_custom_call.1} parent=11 // pred_region
          _
        $region20: #{tpu_custom_call.1} parent=11 // pred_fallthru
          _
        // Predicated region
        $region21: #{tpu_custom_call.1} parent=11 // pred_check
          %p303 = pneg %p98
        $region22: #{tpu_custom_call.1} parent=11 // pred_check_branch
          %305 = sbr.rel (%p303) target = $region24
        $region23: #{tpu_custom_call.1} parent=11 // pred_region
          %307 = vsyncadd [#allocation9], 0
          %s308 = sshll.u32 %s3, 4
          %s309 = int_to_ptr.hbm [resolvable:$true] %s308
          %s310 = sshll.u32 [#allocation8], 4
          %s311 = int_to_ptr.vmem [resolvable:$true] %s310
          %316 = dma.hbm_to_vmem [thread:$0]  %s309, 2048, %s311, [#allocation9], 128, 128, 8
        $region24: #{tpu_custom_call.1} parent=11 // pred_fallthru
          _
        // Predicated region
        $region25: #{tpu_custom_call.1} parent=11 // pred_check
          %p317 = pneg %p119
        $region26: #{tpu_custom_call.1} parent=11 // pred_check_branch
          %319 = sbr.rel (%p317) target = $region28
        $region27: #{tpu_custom_call.1} parent=11 // pred_region
          _
        $region28: #{tpu_custom_call.1} parent=11 // pred_fallthru
          _
        // Predicated region
        $region29: #{tpu_custom_call.1} parent=11 // pred_check
          %p320 = pneg %p140
        $region30: #{tpu_custom_call.1} parent=11 // pred_check_branch
          %322 = sbr.rel (%p320) target = $region32
        $region31: #{tpu_custom_call.1} parent=11 // pred_region
          %324 = vsyncadd [#allocation9], 0
          %s325 = sshll.u32 %s5, 4
          %s326 = int_to_ptr.hbm [resolvable:$true] %s325
          %s327 = sshll.u32 [#allocation10], 4
          %s328 = int_to_ptr.vmem [resolvable:$true] %s327
          %333 = dma.hbm_to_vmem [thread:$0]  %s326, 128, %s328, [#allocation9], 64, 64, 4
        $region32: #{tpu_custom_call.1} parent=11 // pred_fallthru
          _
        // Predicated region
        $region33: #{tpu_custom_call.1} parent=11 // pred_check
          %p334 = pneg %p161
        $region34: #{tpu_custom_call.1} parent=11 // pred_check_branch
          %336 = sbr.rel (%p334) target = $region36
        $region35: #{tpu_custom_call.1} parent=11 // pred_region
          _
        $region36: #{tpu_custom_call.1} parent=11 // pred_fallthru
          _
        // Predicated region
        $region37: #{tpu_custom_call.1} parent=11 // pred_check
          %p337 = pneg %p182
        $region38: #{tpu_custom_call.1} parent=11 // pred_check_branch
          %339 = sbr.rel (%p337) target = $region40
        $region39: #{tpu_custom_call.1} parent=11 // pred_region
          _
        $region40: #{tpu_custom_call.1} parent=11 // pred_fallthru
          _
        // Predicated region
        $region41: #{tpu_custom_call.1} parent=11 // pred_check
          %p340 = pneg %p203
        $region42: #{tpu_custom_call.1} parent=11 // pred_check_branch
          %342 = sbr.rel (%p340) target = $region44
        $region43: #{tpu_custom_call.1} parent=11 // pred_region
          _
        $region44: #{tpu_custom_call.1} parent=11 // pred_fallthru
          _
        // Predicated region
        $region45: #{tpu_custom_call.1} parent=11 // pred_check
          %p343 = pneg %p224
        $region46: #{tpu_custom_call.1} parent=11 // pred_check_branch
          %345 = sbr.rel (%p343) target = $region48
        $region47: #{tpu_custom_call.1} parent=11 // pred_region
          %347 = vsyncadd [#allocation12], 0
          %s348 = sshll.u32 %s9, 4
          %s349 = int_to_ptr.hbm [resolvable:$true] %s348
          %s350 = sshll.u32 [#allocation11], 4
          %s351 = int_to_ptr.vmem [resolvable:$true] %s350
          %356 = dma.hbm_to_vmem [thread:$0]  %s349, 1024, %s351, [#allocation12], 64, 64, 4
        $region48: #{tpu_custom_call.1} parent=11 // pred_fallthru
          _
        // Predicated region
        $region49: #{tpu_custom_call.1} parent=11 // pred_check
          %p357 = pneg %p245
        $region50: #{tpu_custom_call.1} parent=11 // pred_check_branch
          %359 = sbr.rel (%p357) target = $region52
        $region51: #{tpu_custom_call.1} parent=11 // pred_region
          _
        $region52: #{tpu_custom_call.1} parent=11 // pred_fallthru
          _
      $region12: #{tpu_custom_call.1} parent=5 // pred_fallthru
        _
      %p360 = scmp.lt.s32.totalorder %s23, 6
      // Predicated region
      $region53: #{tpu_custom_call.1} parent=5 // pred_check
        %p361 = pneg %p360
      $region54: #{tpu_custom_call.1} parent=5 // pred_check_branch
        %363 = sbr.rel (%p361) target = $region56
      $region55: #{tpu_custom_call.1} parent=5 // pred_region
        _
      $region56: #{tpu_custom_call.1} parent=5 // pred_fallthru
        _
      %p364 = scmp.le.s32.totalorder 1, %s23
      %p365 = scmp.lt.s32.totalorder %s23, 7
      %p366 = pnand %p364, %p365
      %p367 = pneg %p366
      // Predicated region
      $region57: #{tpu_custom_call.1} parent=5 // pred_check
        _
      $region58: #{tpu_custom_call.1} parent=5 // pred_check_branch
        %369 = sbr.rel (%p366) target = $region60
      $region59: #{tpu_custom_call.1} parent=5 // pred_region
        %s370 = ssub.s32 %s23, 1
        // Predicated region
        $region61: #{tpu_custom_call.1} parent=59 // pred_check
          %p371 = pneg %p56
        $region62: #{tpu_custom_call.1} parent=59 // pred_check_branch
          %373 = sbr.rel (%p371) target = $region64
        $region63: #{tpu_custom_call.1} parent=59 // pred_region
          %375 = dma.done [#allocation6], 16
        $region64: #{tpu_custom_call.1} parent=59 // pred_fallthru
          _
        // Predicated region
        $region65: #{tpu_custom_call.1} parent=59 // pred_check
          %p376 = pneg %p98
        $region66: #{tpu_custom_call.1} parent=59 // pred_check_branch
          %378 = sbr.rel (%p376) target = $region68
        $region67: #{tpu_custom_call.1} parent=59 // pred_region
          %380 = dma.done [#allocation9], 2048
        $region68: #{tpu_custom_call.1} parent=59 // pred_fallthru
          _
        // Predicated region
        $region69: #{tpu_custom_call.1} parent=59 // pred_check
          %p381 = pneg %p140
        $region70: #{tpu_custom_call.1} parent=59 // pred_check_branch
          %383 = sbr.rel (%p381) target = $region72
        $region71: #{tpu_custom_call.1} parent=59 // pred_region
          %385 = dma.done [#allocation9], 128
        $region72: #{tpu_custom_call.1} parent=59 // pred_fallthru
          _
        // Predicated region
        $region73: #{tpu_custom_call.1} parent=59 // pred_check
          %p386 = pneg %p224
        $region74: #{tpu_custom_call.1} parent=59 // pred_check_branch
          %388 = sbr.rel (%p386) target = $region76
        $region75: #{tpu_custom_call.1} parent=59 // pred_region
          %390 = dma.done [#allocation12], 1024
        $region76: #{tpu_custom_call.1} parent=59 // pred_fallthru
          _
        %p391 = pneg %p56
        %p392 = pneg %p53
        %p393 = pneg %p77
        %p394 = pneg %p74
        %p395 = pneg %p98
        %p396 = pneg %p95
        %p397 = pneg %p119
        %p398 = pneg %p116
        %p399 = pneg %p140
        %p400 = pneg %p137
        %p401 = pneg %p161
        %p402 = pneg %p158
        %p403 = pneg %p182
        %p404 = pneg %p179
        %p405 = pneg %p203
        %p406 = pneg %p200
        %p407 = pneg %p224
        %p408 = pneg %p221
        %p409 = pneg %p245
        %p410 = pneg %p242
        %p411 = pneg %p273
        %p412 = pneg %p270
        %s413 = sand.u32 %s260, 1
        %s414 = scalar_lea.sflag [#allocation7], %s413
        %s415 = sand.u32 %s260, 1
        %s416 = smul.addr %s415, 16
        %s417 = scalar_lea.vmem [#allocation13], %s416
        %s418 = smul.u32 2, %s33
        %p419 = scmp.lt.s32.totalorder %s33, 0
        %s420 = ssub.s32 0, %s33
        %s421 = scalar_select %p419, %s420, %s33
        %s422 = sand.u32 %s421, 1
        %s423 = ssub.s32 0, %s422
        %s424 = scalar_select %p419, %s423, %s422
        %p425 = scmp.eq.s32.totalorder %s33, 0
        // Predicated region
        $region77: #{tpu_custom_call.1} parent=59 // pred_check
          %p426 = pneg %p425
        $region78: #{tpu_custom_call.1} parent=59 // pred_check_branch
          %428 = sbr.rel (%p426) target = $region80
        $region79: #{tpu_custom_call.1} parent=59 // pred_region
          %s429 = smul.u32 %s33, 16
          %s430 = smul.u32 %s32, 72
          %s431 = sadd.s32 %s429, %s430
          %s432 = scalar_lea.hbm %s0, %s431
          %s433 = smul.u32 %s424, 32
          %s434 = scalar_lea.vmem [#allocation2], %s433
          %s435 = scalar_lea.sflag [#allocation3], %s424
          // Predicated region
          $region81: #{tpu_custom_call.1} parent=79 // pred_check
            _
          $region82: #{tpu_custom_call.1} parent=79 // pred_check_branch
            %437 = sbr.rel target = $region84
          $region83: #{tpu_custom_call.1} parent=79 // pred_region
            %438 = sst [smem:[#allocation16]] [#allocation15]
            %439 = sst [smem:[#allocation17]] [#allocation14]
          $region84: #{tpu_custom_call.1} parent=79 // pred_fallthru
            _
          %441 = shalt.err (0)
          %s443 = sshll.u32 %s432, 4
          %s444 = int_to_ptr.hbm [resolvable:$true] %s443
          %s445 = sshll.u32 %s434, 4
          %s446 = int_to_ptr.vmem [resolvable:$true] %s445
          %448 = dma.hbm_to_vmem [thread:$0]  %s444, 512, %s446, %s435
        $region80: #{tpu_custom_call.1} parent=59 // pred_fallthru
          _
        %s449 = sadd.s32 %s33, 1
        %p450 = scmp.lt.s32.totalorder %s449, 3
        // Predicated region
        $region85: #{tpu_custom_call.1} parent=59 // pred_check
          %p451 = pneg %p450
        $region86: #{tpu_custom_call.1} parent=59 // pred_check_branch
          %453 = sbr.rel (%p451) target = $region88
        $region87: #{tpu_custom_call.1} parent=59 // pred_region
          %s454 = ssub.s32 1, %s424
          %s455 = smul.u32 %s449, 16
          %s456 = smul.u32 %s32, 72
          %s457 = sadd.s32 %s455, %s456
          %s458 = scalar_lea.hbm %s0, %s457
          %s459 = smul.u32 %s454, 32
          %s460 = scalar_lea.vmem [#allocation2], %s459
          %s461 = scalar_lea.sflag [#allocation3], %s454
          // Predicated region
          $region89: #{tpu_custom_call.1} parent=87 // pred_check
            _
          $region90: #{tpu_custom_call.1} parent=87 // pred_check_branch
            %463 = sbr.rel target = $region92
          $region91: #{tpu_custom_call.1} parent=87 // pred_region
            %464 = sst [smem:[#allocation16]] [#allocation19]
            %465 = sst [smem:[#allocation17]] [#allocation18]
          $region92: #{tpu_custom_call.1} parent=87 // pred_fallthru
            _
          %467 = shalt.err (0)
          %s469 = sshll.u32 %s458, 4
          %s470 = int_to_ptr.hbm [resolvable:$true] %s469
          %s471 = sshll.u32 %s460, 4
          %s472 = int_to_ptr.vmem [resolvable:$true] %s471
          %474 = dma.hbm_to_vmem [thread:$0]  %s470, 512, %s472, %s461
        $region88: #{tpu_custom_call.1} parent=59 // pred_fallthru
          _
        %s475 = smul.u32 %s33, 16
        %s476 = smul.u32 %s424, 32
        %s477 = scalar_lea.vmem [#allocation2], %s476
        %s478 = scalar_lea.sflag [#allocation3], %s424
        %s479 = smul.u32 32, 1
        %s480 = sshll.u32 %s479, 4
        %481 = dma.done %s478, %s480
        %v482 = vld [vmem:[%s477] sm:$0xff]
        %v483 = vld [vmem:[%s477 + $0x8] sm:$0xff]
        %v484 = vld [vmem:[%s477 + $0x10] sm:$0xff]
        %v485 = vld [vmem:[%s477 + $0x18] sm:$0xff]
        %v486 = vld [vmem:[#allocation5] sm:$0x1]
        %v487 = vld [vmem:[%s2] sm:$0x1]
        %488 = vadd.xlane.f32.xlu0 %v482
        %v489 = vpop.xlane.xlu0 %488
        %490 = vadd.xlane.f32.xlu0 %v483
        %v491 = vpop.xlane.xlu0 %490
        %492 = vadd.xlane.f32.xlu0 %v484
        %v493 = vpop.xlane.xlu0 %492
        %494 = vadd.xlane.f32.xlu0 %v485
        %v495 = vpop.xlane.xlu0 %494
        %v496 = vmul.f32 %v489, 0.03125
        %v497 = vmul.f32 %v491, 0.03125
        %v498 = vmul.f32 %v493, 0.03125
        %v499 = vmul.f32 %v495, 0.03125
        %v500 = vmul.f32 %v482, %v482
        %v501 = vmul.f32 %v483, %v483
        %v502 = vmul.f32 %v484, %v484
        %v503 = vmul.f32 %v485, %v485
        %504 = vadd.xlane.f32.xlu0 %v500
        %v505 = vpop.xlane.xlu0 %504
        %506 = vadd.xlane.f32.xlu0 %v501
        %v507 = vpop.xlane.xlu0 %506
        %508 = vadd.xlane.f32.xlu0 %v502
        %v509 = vpop.xlane.xlu0 %508
        %510 = vadd.xlane.f32.xlu0 %v503
        %v511 = vpop.xlane.xlu0 %510
        %v512 = vmul.f32 %v505, 0.03125
        %v513 = vmul.f32 %v507, 0.03125
        %v514 = vmul.f32 %v509, 0.03125
        %v515 = vmul.f32 %v511, 0.03125
        %v516 = vmul.f32 %v496, %v496
        %v517 = vmul.f32 %v497, %v497
        %v518 = vmul.f32 %v498, %v498
        %v519 = vmul.f32 %v499, %v499
        %v520 = vsub.f32 %v512, %v516
        %v521 = vsub.f32 %v513, %v517
        %v522 = vsub.f32 %v514, %v518
        %v523 = vsub.f32 %v515, %v519
        %v524 = vmax.f32 %v520, 0.0
        %v525 = vmax.f32 %v521, 0.0
        %v526 = vmax.f32 %v522, 0.0
        %v527 = vmax.f32 %v523, 0.0
        %v528 = vsub.f32 %v482, %v496
        %v529 = vsub.f32 %v483, %v497
        %v530 = vsub.f32 %v484, %v498
        %v531 = vsub.f32 %v485, %v499
        %v532 = vadd.f32 %v524, 1e-05
        %v533 = vadd.f32 %v525, 1e-05
        %v534 = vadd.f32 %v526, 1e-05
        %v535 = vadd.f32 %v527, 1e-05
        %v536 = vrsqrt.pop %v532
        %v537 = vmul.f32 %v536, %v532
        %v538 = vmul.f32 %v537, %v536
        %v539 = vmul.f32 0.5, %v538
        %v540 = vsub.f32 1.5, %v539
        %v541 = vmul.f32 %v536, %v540
        %vm542 = vweird.f32 %v532
        %vm543 = vweird.f32 %v536
        %vm544 = vmor %vm542, %vm543
        %v545 = vsel %vm544, %v536, %v541
        %v546 = vrsqrt.pop %v533
        %v547 = vmul.f32 %v546, %v533
        %v548 = vmul.f32 %v547, %v546
        %v549 = vmul.f32 0.5, %v548
        %v550 = vsub.f32 1.5, %v549
        %v551 = vmul.f32 %v546, %v550
        %vm552 = vweird.f32 %v533
        %vm553 = vweird.f32 %v546
        %vm554 = vmor %vm552, %vm553
        %v555 = vsel %vm554, %v546, %v551
        %v556 = vrsqrt.pop %v534
        %v557 = vmul.f32 %v556, %v534
        %v558 = vmul.f32 %v557, %v556
        %v559 = vmul.f32 0.5, %v558
        %v560 = vsub.f32 1.5, %v559
        %v561 = vmul.f32 %v556, %v560
        %vm562 = vweird.f32 %v534
        %vm563 = vweird.f32 %v556
        %vm564 = vmor %vm562, %vm563
        %v565 = vsel %vm564, %v556, %v561
        %v566 = vrsqrt.pop %v535
        %v567 = vmul.f32 %v566, %v535
        %v568 = vmul.f32 %v567, %v566
        %v569 = vmul.f32 0.5, %v568
        %v570 = vsub.f32 1.5, %v569
        %v571 = vmul.f32 %v566, %v570
        %vm572 = vweird.f32 %v535
        %vm573 = vweird.f32 %v566
        %vm574 = vmor %vm572, %vm573
        %v575 = vsel %vm574, %v566, %v571
        %v576 = vmul.f32 %v528, %v545
        %v577 = vmul.f32 %v529, %v555
        %v578 = vmul.f32 %v530, %v565
        %v579 = vmul.f32 %v531, %v575
        %v581 = vperm.slane %v486, 0
        %v583 = vmul.f32 %v576, %v581
        %v584 = vmul.f32 %v577, %v581
        %v585 = vmul.f32 %v578, %v581
        %v586 = vmul.f32 %v579, %v581
        %v588 = vperm.slane %v487, 0
        %v590 = vadd.f32 %v583, %v588
        %v591 = vadd.f32 %v584, %v588
        %v592 = vadd.f32 %v585, %v588
        %v593 = vadd.f32 %v586, %v588
        %v594 = vpack.c.bf16 %v591, %v590
        %v595 = vpack.c.bf16 %v593, %v592
        %v596 = vld [vmem:[#allocation8] sm:$0xff]
        %v597 = vld [vmem:[#allocation8 + $0x8] sm:$0xff]
        %v598 = vld [vmem:[#allocation8 + $0x10] sm:$0xff]
        %v599 = vld [vmem:[#allocation8 + $0x18] sm:$0xff]
        %v600 = vld [vmem:[#allocation8 + $0x20] sm:$0xff]
        %v601 = vld [vmem:[#allocation8 + $0x28] sm:$0xff]
        %v602 = vld [vmem:[#allocation8 + $0x30] sm:$0xff]
        %v603 = vld [vmem:[#allocation8 + $0x38] sm:$0xff]
        %v604 = vld [vmem:[#allocation8 + $0x40] sm:$0xff]
        %v605 = vld [vmem:[#allocation8 + $0x48] sm:$0xff]
        %v606 = vld [vmem:[#allocation8 + $0x50] sm:$0xff]
        %v607 = vld [vmem:[#allocation8 + $0x58] sm:$0xff]
        %v608 = vld [vmem:[#allocation8 + $0x60] sm:$0xff]
        %v609 = vld [vmem:[#allocation8 + $0x68] sm:$0xff]
        %v610 = vld [vmem:[#allocation8 + $0x70] sm:$0xff]
        %v611 = vld [vmem:[#allocation8 + $0x78] sm:$0xff]
        %v612 = vld [vmem:[%s4] sm:$0x3]
        %v614 = vperm.slane %v612, 0
        %v615 = vperm.slane %v612, 1
        %v634 = vunpack.c.l.b16 %v596
        %v635 = vunpack.c.h.b16 %v596
        %v636 = vunpack.c.l.b16 %v597
        %v637 = vunpack.c.h.b16 %v597
        %v638 = vunpack.c.l.b16 %v598
        %v639 = vunpack.c.h.b16 %v598
        %v640 = vunpack.c.l.b16 %v599
        %v641 = vunpack.c.h.b16 %v599
        %v642 = vunpack.c.l.b16 %v600
        %v643 = vunpack.c.h.b16 %v600
        %v644 = vunpack.c.l.b16 %v601
        %v645 = vunpack.c.h.b16 %v601
        %v646 = vunpack.c.l.b16 %v602
        %v647 = vunpack.c.h.b16 %v602
        %v648 = vunpack.c.l.b16 %v603
        %v649 = vunpack.c.h.b16 %v603
        %v650 = vunpack.c.l.b16 %v604
        %v651 = vunpack.c.h.b16 %v604
        %v652 = vunpack.c.l.b16 %v605
        %v653 = vunpack.c.h.b16 %v605
        %v654 = vunpack.c.l.b16 %v606
        %v655 = vunpack.c.h.b16 %v606
        %v656 = vunpack.c.l.b16 %v607
        %v657 = vunpack.c.h.b16 %v607
        %v658 = vunpack.c.l.b16 %v608
        %v659 = vunpack.c.h.b16 %v608
        %v660 = vunpack.c.l.b16 %v609
        %v661 = vunpack.c.h.b16 %v609
        %v662 = vunpack.c.l.b16 %v610
        %v663 = vunpack.c.h.b16 %v610
        %v664 = vunpack.c.l.b16 %v611
        %v665 = vunpack.c.h.b16 %v611
        %v666 = vpack.c.b16 %v636, %v634
        %v667 = vpack.c.b16 %v637, %v635
        %v668 = vpack.c.b16 %v640, %v638
        %v669 = vpack.c.b16 %v641, %v639
        %v670 = vpack.c.b16 %v644, %v642
        %v671 = vpack.c.b16 %v645, %v643
        %v672 = vpack.c.b16 %v648, %v646
        %v673 = vpack.c.b16 %v649, %v647
        %v674 = vpack.c.b16 %v652, %v650
        %v675 = vpack.c.b16 %v653, %v651
        %v676 = vpack.c.b16 %v656, %v654
        %v677 = vpack.c.b16 %v657, %v655
        %v678 = vpack.c.b16 %v660, %v658
        %v679 = vpack.c.b16 %v661, %v659
        %v680 = vpack.c.b16 %v664, %v662
        %v681 = vpack.c.b16 %v665, %v663
        %698 = vmatpush.bf16.msra.mxu0 %v680
        %699 = vmatpush.bf16.msra.mxu0 %v678
        %700 = vmatpush.bf16.msra.mxu0 %v676
        %701 = vmatpush.bf16.msra.mxu0 %v674
        %702 = vmatpush.bf16.msra.mxu0 %v672
        %703 = vmatpush.bf16.msra.mxu0 %v670
        %704 = vmatpush.bf16.msra.mxu0 %v668
        %705 = vmatpush.bf16.msra.mxu0 %v666
        %706 = vmatmul.bf16.gmra.mxu0 %v594
        %v707 = vpop.f32.mrf.mxu0
        %v708 = vadd.f32 %v614, %v707
        %v709 = vpop.f32.mrf.mxu0
        %v710 = vadd.f32 %v614, %v709
        %711 = vmatmul.bf16.gmra.mxu0 %v595
        %v712 = vpop.f32.mrf.mxu0
        %v713 = vadd.f32 %v614, %v712
        %v714 = vpop.f32.mrf.mxu0
        %v715 = vadd.f32 %v614, %v714
        %716 = vdwg.mxu0
        %717 = vmatpush.bf16.msra.mxu0 %v681
        %718 = vmatpush.bf16.msra.mxu0 %v679
        %719 = vmatpush.bf16.msra.mxu0 %v677
        %720 = vmatpush.bf16.msra.mxu0 %v675
        %721 = vmatpush.bf16.msra.mxu0 %v673
        %722 = vmatpush.bf16.msra.mxu0 %v671
        %723 = vmatpush.bf16.msra.mxu0 %v669
        %724 = vmatpush.bf16.msra.mxu0 %v667
        %725 = vmatmul.bf16.gmra.mxu0 %v594
        %v726 = vpop.f32.mrf.mxu0
        %v727 = vadd.f32 %v615, %v726
        %v728 = vpop.f32.mrf.mxu0
        %v729 = vadd.f32 %v615, %v728
        %730 = vmatmul.bf16.gmra.mxu0 %v595
        %v731 = vpop.f32.mrf.mxu0
        %v732 = vadd.f32 %v615, %v731
        %v733 = vpop.f32.mrf.mxu0
        %v734 = vadd.f32 %v615, %v733
        %735 = vdwg.mxu0
        %v736 = vxor.u32 %v727, 2147483648
        %v737 = vxor.u32 %v729, 2147483648
        %v738 = vxor.u32 %v732, 2147483648
        %v739 = vxor.u32 %v734, 2147483648
        %v740 = vmul.f32 %v736, 1.442695
        %v741 = vpow.pop %v740
        %v742 = vmul.f32 %v737, 1.442695
        %v743 = vpow.pop %v742
        %v744 = vmul.f32 %v738, 1.442695
        %v745 = vpow.pop %v744
        %v746 = vmul.f32 %v739, 1.442695
        %v747 = vpow.pop %v746
        %v748 = vadd.f32 %v741, 1.0
        %v749 = vadd.f32 %v743, 1.0
        %v750 = vadd.f32 %v745, 1.0
        %v751 = vadd.f32 %v747, 1.0
        %v752 = vrcp.pop %v748
        %v753 = vmul.f32 %v748, %v752
        %v754 = vsub.f32 1.0, %v753
        %v755 = vmul.f32 %v752, %v754
        %v756 = vadd.f32 %v752, %v755
        %vm757 = vweird.f32 %v748
        %vm758 = vweird.f32 %v752
        %vm759 = vmor %vm757, %vm758
        %v760 = vsel %vm759, %v752, %v756
        %v761 = vand.u32 2147483647, %v748
        %vm762 = vcmp.eq.f32.partialorder %v761, 8.507059e+37
        %v763 = vand.u32 %v748, 2147483648
        %v764 = vor.u32 1.1754944e-38, %v763
        %v765 = vsel %vm762, %v764, %v760
        %v766 = vmul.f32 1.0, %v765
        %v767 = vrcp.pop %v749
        %v768 = vmul.f32 %v749, %v767
        %v769 = vsub.f32 1.0, %v768
        %v770 = vmul.f32 %v767, %v769
        %v771 = vadd.f32 %v767, %v770
        %vm772 = vweird.f32 %v749
        %vm773 = vweird.f32 %v767
        %vm774 = vmor %vm772, %vm773
        %v775 = vsel %vm774, %v767, %v771
        %v776 = vand.u32 2147483647, %v749
        %vm777 = vcmp.eq.f32.partialorder %v776, 8.507059e+37
        %v778 = vand.u32 %v749, 2147483648
        %v779 = vor.u32 1.1754944e-38, %v778
        %v780 = vsel %vm777, %v779, %v775
        %v781 = vmul.f32 1.0, %v780
        %v782 = vrcp.pop %v750
        %v783 = vmul.f32 %v750, %v782
        %v784 = vsub.f32 1.0, %v783
        %v785 = vmul.f32 %v782, %v784
        %v786 = vadd.f32 %v782, %v785
        %vm787 = vweird.f32 %v750
        %vm788 = vweird.f32 %v782
        %vm789 = vmor %vm787, %vm788
        %v790 = vsel %vm789, %v782, %v786
        %v791 = vand.u32 2147483647, %v750
        %vm792 = vcmp.eq.f32.partialorder %v791, 8.507059e+37
        %v793 = vand.u32 %v750, 2147483648
        %v794 = vor.u32 1.1754944e-38, %v793
        %v795 = vsel %vm792, %v794, %v790
        %v796 = vmul.f32 1.0, %v795
        %v797 = vrcp.pop %v751
        %v798 = vmul.f32 %v751, %v797
        %v799 = vsub.f32 1.0, %v798
        %v800 = vmul.f32 %v797, %v799
        %v801 = vadd.f32 %v797, %v800
        %vm802 = vweird.f32 %v751
        %vm803 = vweird.f32 %v797
        %vm804 = vmor %vm802, %vm803
        %v805 = vsel %vm804, %v797, %v801
        %v806 = vand.u32 2147483647, %v751
        %vm807 = vcmp.eq.f32.partialorder %v806, 8.507059e+37
        %v808 = vand.u32 %v751, 2147483648
        %v809 = vor.u32 1.1754944e-38, %v808
        %v810 = vsel %vm807, %v809, %v805
        %v811 = vmul.f32 1.0, %v810
        %v812 = vmul.f32 %v708, %v766
        %v813 = vmul.f32 %v710, %v781
        %v814 = vmul.f32 %v713, %v796
        %v815 = vmul.f32 %v715, %v811
        %v816 = vlaneseq
        %v817 = vshrl.u32 %v816, 7
        %v818 = vadd.s32 %v817, 8
        %v819 = vadd.s32 %v817, 16
        %v820 = vadd.s32 %v817, 24
        %s821 = ssub.s32 %s475, 7
        %v822 = vstv %s821
        %v823 = vadd.s32 %v817, %v822
        %v824 = vadd.s32 %v818, %v822
        %v825 = vadd.s32 %v819, %v822
        %v826 = vadd.s32 %v820, %v822
        %vm827 = vcmp.ge.s32.totalorder %v823, 0
        %vm828 = vcmp.ge.s32.totalorder %v824, 0
        %vm829 = vcmp.ge.s32.totalorder %v825, 0
        %vm830 = vcmp.ge.s32.totalorder %v826, 0
        %vm831 = vcmp.lt.s32.totalorder %v823, 40
        %vm832 = vcmp.lt.s32.totalorder %v824, 40
        %vm833 = vcmp.lt.s32.totalorder %v825, 40
        %vm834 = vcmp.lt.s32.totalorder %v826, 40
        %vm835 = vmand %vm827, %vm831
        %vm836 = vmand %vm828, %vm832
        %vm837 = vmand %vm829, %vm833
        %vm838 = vmand %vm830, %vm834
        %v839 = vsel %vm835, 1, 0
        %v840 = vsel %vm836, 1, 0
        %v841 = vsel %vm837, 1, 0
        %v842 = vsel %vm838, 1, 0
        %vm843 = vcmp.eq.s32.totalorder %v839, 1
        %vm844 = vcmp.eq.s32.totalorder %v840, 1
        %vm845 = vcmp.eq.s32.totalorder %v841, 1
        %vm846 = vcmp.eq.s32.totalorder %v842, 1
        %v847 = vsel %vm843, %v812, 0.0
        %v848 = vsel %vm844, %v813, 0.0
        %v849 = vsel %vm845, %v814, 0.0
        %v850 = vsel %vm846, %v815, 0.0
        %v851 = vpack.c.bf16 %v847, %v847
        %v852 = vpack.c.bf16 %v848, %v848
        %v853 = vpack.c.bf16 %v849, %v849
        %v854 = vpack.c.bf16 %v850, %v850
        %855 = vst [vmem:[#allocation4] sm:$0xf] %v851
        %856 = vst [vmem:[#allocation4 + $0x4] sm:$0xf] %v852
        %857 = vst [vmem:[#allocation4 + $0x8] sm:$0xf] %v853
        %858 = vst [vmem:[#allocation4 + $0xc] sm:$0xf] %v854
        %v859 = vld [vmem:[#allocation10] sm:$0xf]
        %v860 = vld [vmem:[#allocation10 + $0x4] sm:$0xf]
        %v861 = vld [vmem:[%s6] sm:$0x1]
        %v862 = vld [vmem:[#allocation4] sm:$0xf]
        %v863 = vld [vmem:[#allocation4 + $0x4] sm:$0xf]
        %v865 = vpack.i.b16 %v859, %v859
        %v867 = vperm.slane %v865, 0
        %v868 = vunpack.c.l.bf16 %v862
        %v869 = vunpack.c.l.bf16 %v863
        %v870 = vunpack.c.l.bf16 %v867
        %v871 = vmul.f32 %v868, %v870
        %v872 = vmul.f32 %v869, %v870
        %v873 = vpack.c.bf16 %v871, %v871
        %v874 = vpack.c.bf16 %v872, %v872
        %v875 = vunpack.c.l.bf16 %v873
        %v876 = vunpack.c.l.bf16 %v874
        %v878 = vperm.slane %v861, 0
        %v880 = vadd.f32 %v878, %v875
        %v881 = vadd.f32 %v878, %v876
        %v882 = vld [vmem:[#allocation4 + $0x8] sm:$0x1]
        %v883 = vshrl.u32 %v859, 16
        %v884 = vpack.i.b16 %v883, %v883
        %v886 = vperm.slane %v884, 0
        %v887 = vunpack.c.l.bf16 %v882
        %v888 = vunpack.c.l.bf16 %v886
        %v889 = vmul.f32 %v868, %v888
        %v890 = vmul.f32 %v869, %v888
        %v891 = vmul.f32 %v887, %v888
        %v892 = vpack.c.bf16 %v889, %v889
        %v893 = vpack.c.bf16 %v890, %v890
        %v894 = vpack.c.bf16 %v891, %v891
        %v895 = vunpack.c.l.bf16 %v892
        %v896 = vunpack.c.l.bf16 %v893
        %v897 = vunpack.c.l.bf16 %v894
        %vm901 = vcmask 1046528
        %v902 = vrot.slane %v895, 1
        %v903 = vrot.slane %v896, 1
        %v904 = vsel %vm901, %v902, %v903
        %v905 = vrot.slane %v897, 1
        %v906 = vsel %vm901, %v903, %v905
        %v909 = vadd.f32 %v880, %v904
        %v910 = vadd.f32 %v881, %v906
        %v911 = vld [vmem:[#allocation4] sm:$0xe]
        %v912 = vperm.slane %v865, 1
        %v913 = vunpack.c.l.bf16 %v911
        %v914 = vunpack.c.l.bf16 %v912
        %v915 = vmul.f32 %v913, %v914
        %v916 = vmul.f32 %v869, %v914
        %v917 = vmul.f32 %v887, %v914
        %v918 = vpack.c.bf16 %v915, %v915
        %v919 = vpack.c.bf16 %v916, %v916
        %v920 = vpack.c.bf16 %v917, %v917
        %v921 = vunpack.c.l.bf16 %v918
        %v922 = vunpack.c.l.bf16 %v919
        %v923 = vunpack.c.l.bf16 %v920
        %vm927 = vcmask 1045504
        %v928 = vrot.slane %v921, 2
        %v929 = vrot.slane %v922, 2
        %v930 = vsel %vm927, %v928, %v929
        %v931 = vrot.slane %v923, 2
        %v932 = vsel %vm927, %v929, %v931
        %v935 = vadd.f32 %v909, %v930
        %v936 = vadd.f32 %v910, %v932
        %v937 = vld [vmem:[#allocation4 + $0x8] sm:$0x3]
        %v938 = vperm.slane %v884, 1
        %v939 = vunpack.c.l.bf16 %v937
        %v940 = vunpack.c.l.bf16 %v938
        %v941 = vmul.f32 %v913, %v940
        %v942 = vmul.f32 %v869, %v940
        %v943 = vmul.f32 %v939, %v940
        %v944 = vpack.c.bf16 %v941, %v941
        %v945 = vpack.c.bf16 %v942, %v942
        %v946 = vpack.c.bf16 %v943, %v943
        %v947 = vunpack.c.l.bf16 %v944
        %v948 = vunpack.c.l.bf16 %v945
        %v949 = vunpack.c.l.bf16 %v946
        %vm953 = vcmask 1044480
        %v954 = vrot.slane %v947, 3
        %v955 = vrot.slane %v948, 3
        %v956 = vsel %vm953, %v954, %v955
        %v957 = vrot.slane %v949, 3
        %v958 = vsel %vm953, %v955, %v957
        %v961 = vadd.f32 %v935, %v956
        %v962 = vadd.f32 %v936, %v958
        %v963 = vld [vmem:[#allocation4] sm:$0xc]
        %v964 = vperm.slane %v865, 2
        %v965 = vunpack.c.l.bf16 %v963
        %v966 = vunpack.c.l.bf16 %v964
        %v967 = vmul.f32 %v965, %v966
        %v968 = vmul.f32 %v869, %v966
        %v969 = vmul.f32 %v939, %v966
        %v970 = vpack.c.bf16 %v967, %v967
        %v971 = vpack.c.bf16 %v968, %v968
        %v972 = vpack.c.bf16 %v969, %v969
        %v973 = vunpack.c.l.bf16 %v970
        %v974 = vunpack.c.l.bf16 %v971
        %v975 = vunpack.c.l.bf16 %v972
        %vm979 = vcmask 1043456
        %v980 = vrot.slane %v973, 4
        %v981 = vrot.slane %v974, 4
        %v982 = vsel %vm979, %v980, %v981
        %v983 = vrot.slane %v975, 4
        %v984 = vsel %vm979, %v981, %v983
        %v987 = vadd.f32 %v961, %v982
        %v988 = vadd.f32 %v962, %v984
        %v989 = vld [vmem:[#allocation4 + $0x8] sm:$0x7]
        %v990 = vperm.slane %v884, 2
        %v991 = vunpack.c.l.bf16 %v989
        %v992 = vunpack.c.l.bf16 %v990
        %v993 = vmul.f32 %v965, %v992
        %v994 = vmul.f32 %v869, %v992
        %v995 = vmul.f32 %v991, %v992
        %v996 = vpack.c.bf16 %v993, %v993
        %v997 = vpack.c.bf16 %v994, %v994
        %v998 = vpack.c.bf16 %v995, %v995
        %v999 = vunpack.c.l.bf16 %v996
        %v1000 = vunpack.c.l.bf16 %v997
        %v1001 = vunpack.c.l.bf16 %v998
        %vm1005 = vcmask 1042432
        %v1006 = vrot.slane %v999, 5
        %v1007 = vrot.slane %v1000, 5
        %v1008 = vsel %vm1005, %v1006, %v1007
        %v1009 = vrot.slane %v1001, 5
        %v1010 = vsel %vm1005, %v1007, %v1009
        %v1013 = vadd.f32 %v987, %v1008
        %v1014 = vadd.f32 %v988, %v1010
        %v1015 = vld [vmem:[#allocation4] sm:$0x8]
        %v1016 = vperm.slane %v865, 3
        %v1017 = vunpack.c.l.bf16 %v1015
        %v1018 = vunpack.c.l.bf16 %v1016
        %v1019 = vmul.f32 %v1017, %v1018
        %v1020 = vmul.f32 %v869, %v1018
        %v1021 = vmul.f32 %v991, %v1018
        %v1022 = vpack.c.bf16 %v1019, %v1019
        %v1023 = vpack.c.bf16 %v1020, %v1020
        %v1024 = vpack.c.bf16 %v1021, %v1021
        %v1025 = vunpack.c.l.bf16 %v1022
        %v1026 = vunpack.c.l.bf16 %v1023
        %v1027 = vunpack.c.l.bf16 %v1024
        %vm1031 = vcmask 1041408
        %v1032 = vrot.slane %v1025, 6
        %v1033 = vrot.slane %v1026, 6
        %v1034 = vsel %vm1031, %v1032, %v1033
        %v1035 = vrot.slane %v1027, 6
        %v1036 = vsel %vm1031, %v1033, %v1035
        %v1039 = vadd.f32 %v1013, %v1034
        %v1040 = vadd.f32 %v1014, %v1036
        %v1041 = vld [vmem:[#allocation4 + $0x8] sm:$0xf]
        %v1042 = vperm.slane %v884, 3
        %v1043 = vunpack.c.l.bf16 %v1041
        %v1044 = vunpack.c.l.bf16 %v1042
        %v1045 = vmul.f32 %v1017, %v1044
        %v1046 = vmul.f32 %v869, %v1044
        %v1047 = vmul.f32 %v1043, %v1044
        %v1048 = vpack.c.bf16 %v1045, %v1045
        %v1049 = vpack.c.bf16 %v1046, %v1046
        %v1050 = vpack.c.bf16 %v1047, %v1047
        %v1051 = vunpack.c.l.bf16 %v1048
        %v1052 = vunpack.c.l.bf16 %v1049
        %v1053 = vunpack.c.l.bf16 %v1050
        %vm1057 = vcmask 1040384
        %v1058 = vrot.slane %v1051, 7
        %v1059 = vrot.slane %v1052, 7
        %v1060 = vsel %vm1057, %v1058, %v1059
        %v1061 = vrot.slane %v1053, 7
        %v1062 = vsel %vm1057, %v1059, %v1061
        %v1065 = vadd.f32 %v1039, %v1060
        %v1066 = vadd.f32 %v1040, %v1062
        %v1068 = vpack.i.b16 %v860, %v860
        %v1070 = vperm.slane %v1068, 0
        %v1071 = vunpack.c.l.bf16 %v1070
        %v1072 = vmul.f32 %v869, %v1071
        %v1073 = vmul.f32 %v1043, %v1071
        %v1074 = vpack.c.bf16 %v1072, %v1072
        %v1075 = vpack.c.bf16 %v1073, %v1073
        %v1076 = vunpack.c.l.bf16 %v1074
        %v1077 = vunpack.c.l.bf16 %v1075
        %v1078 = vadd.f32 %v1065, %v1076
        %v1079 = vadd.f32 %v1066, %v1077
        %v1080 = vld [vmem:[#allocation4 + $0x4] sm:$0xf]
        %v1081 = vld [vmem:[#allocation4 + $0x8] sm:$0xf]
        %v1082 = vld [vmem:[#allocation4 + $0xc] sm:$0x1]
        %v1083 = vshrl.u32 %v860, 16
        %v1084 = vpack.i.b16 %v1083, %v1083
        %v1086 = vperm.slane %v1084, 0
        %v1087 = vunpack.c.l.bf16 %v1080
        %v1088 = vunpack.c.l.bf16 %v1081
        %v1089 = vunpack.c.l.bf16 %v1082
        %v1090 = vunpack.c.l.bf16 %v1086
        %v1091 = vmul.f32 %v1087, %v1090
        %v1092 = vmul.f32 %v1088, %v1090
        %v1093 = vmul.f32 %v1089, %v1090
        %v1094 = vpack.c.bf16 %v1091, %v1091
        %v1095 = vpack.c.bf16 %v1092, %v1092
        %v1096 = vpack.c.bf16 %v1093, %v1093
        %v1097 = vunpack.c.l.bf16 %v1094
        %v1098 = vunpack.c.l.bf16 %v1095
        %v1099 = vunpack.c.l.bf16 %v1096
        %v1103 = vrot.slane %v1097, 1
        %v1104 = vrot.slane %v1098, 1
        %v1105 = vsel %vm901, %v1103, %v1104
        %v1106 = vrot.slane %v1099, 1
        %v1107 = vsel %vm901, %v1104, %v1106
        %v1110 = vadd.f32 %v1078, %v1105
        %v1111 = vadd.f32 %v1079, %v1107
        %v1112 = vld [vmem:[#allocation4 + $0x4] sm:$0xe]
        %v1113 = vperm.slane %v1068, 1
        %v1114 = vunpack.c.l.bf16 %v1112
        %v1115 = vunpack.c.l.bf16 %v1113
        %v1116 = vmul.f32 %v1114, %v1115
        %v1117 = vmul.f32 %v1088, %v1115
        %v1118 = vmul.f32 %v1089, %v1115
        %v1119 = vpack.c.bf16 %v1116, %v1116
        %v1120 = vpack.c.bf16 %v1117, %v1117
        %v1121 = vpack.c.bf16 %v1118, %v1118
        %v1122 = vunpack.c.l.bf16 %v1119
        %v1123 = vunpack.c.l.bf16 %v1120
        %v1124 = vunpack.c.l.bf16 %v1121
        %v1128 = vrot.slane %v1122, 2
        %v1129 = vrot.slane %v1123, 2
        %v1130 = vsel %vm927, %v1128, %v1129
        %v1131 = vrot.slane %v1124, 2
        %v1132 = vsel %vm927, %v1129, %v1131
        %v1135 = vadd.f32 %v1110, %v1130
        %v1136 = vadd.f32 %v1111, %v1132
        %v1137 = vld [vmem:[#allocation4 + $0xc] sm:$0x3]
        %v1138 = vperm.slane %v1084, 1
        %v1139 = vunpack.c.l.bf16 %v1137
        %v1140 = vunpack.c.l.bf16 %v1138
        %v1141 = vmul.f32 %v1114, %v1140
        %v1142 = vmul.f32 %v1088, %v1140
        %v1143 = vmul.f32 %v1139, %v1140
        %v1144 = vpack.c.bf16 %v1141, %v1141
        %v1145 = vpack.c.bf16 %v1142, %v1142
        %v1146 = vpack.c.bf16 %v1143, %v1143
        %v1147 = vunpack.c.l.bf16 %v1144
        %v1148 = vunpack.c.l.bf16 %v1145
        %v1149 = vunpack.c.l.bf16 %v1146
        %v1153 = vrot.slane %v1147, 3
        %v1154 = vrot.slane %v1148, 3
        %v1155 = vsel %vm953, %v1153, %v1154
        %v1156 = vrot.slane %v1149, 3
        %v1157 = vsel %vm953, %v1154, %v1156
        %v1160 = vadd.f32 %v1135, %v1155
        %v1161 = vadd.f32 %v1136, %v1157
        %v1162 = vld [vmem:[#allocation4 + $0x4] sm:$0xc]
        %v1163 = vperm.slane %v1068, 2
        %v1164 = vunpack.c.l.bf16 %v1162
        %v1165 = vunpack.c.l.bf16 %v1163
        %v1166 = vmul.f32 %v1164, %v1165
        %v1167 = vmul.f32 %v1088, %v1165
        %v1168 = vmul.f32 %v1139, %v1165
        %v1169 = vpack.c.bf16 %v1166, %v1166
        %v1170 = vpack.c.bf16 %v1167, %v1167
        %v1171 = vpack.c.bf16 %v1168, %v1168
        %v1172 = vunpack.c.l.bf16 %v1169
        %v1173 = vunpack.c.l.bf16 %v1170
        %v1174 = vunpack.c.l.bf16 %v1171
        %v1178 = vrot.slane %v1172, 4
        %v1179 = vrot.slane %v1173, 4
        %v1180 = vsel %vm979, %v1178, %v1179
        %v1181 = vrot.slane %v1174, 4
        %v1182 = vsel %vm979, %v1179, %v1181
        %v1185 = vadd.f32 %v1160, %v1180
        %v1186 = vadd.f32 %v1161, %v1182
        %v1187 = vld [vmem:[#allocation4 + $0xc] sm:$0x7]
        %v1188 = vperm.slane %v1084, 2
        %v1189 = vunpack.c.l.bf16 %v1187
        %v1190 = vunpack.c.l.bf16 %v1188
        %v1191 = vmul.f32 %v1164, %v1190
        %v1192 = vmul.f32 %v1088, %v1190
        %v1193 = vmul.f32 %v1189, %v1190
        %v1194 = vpack.c.bf16 %v1191, %v1191
        %v1195 = vpack.c.bf16 %v1192, %v1192
        %v1196 = vpack.c.bf16 %v1193, %v1193
        %v1197 = vunpack.c.l.bf16 %v1194
        %v1198 = vunpack.c.l.bf16 %v1195
        %v1199 = vunpack.c.l.bf16 %v1196
        %v1203 = vrot.slane %v1197, 5
        %v1204 = vrot.slane %v1198, 5
        %v1205 = vsel %vm1005, %v1203, %v1204
        %v1206 = vrot.slane %v1199, 5
        %v1207 = vsel %vm1005, %v1204, %v1206
        %v1210 = vadd.f32 %v1185, %v1205
        %v1211 = vadd.f32 %v1186, %v1207
        %v1212 = vld [vmem:[#allocation4 + $0x4] sm:$0x8]
        %v1213 = vperm.slane %v1068, 3
        %v1214 = vunpack.c.l.bf16 %v1212
        %v1215 = vunpack.c.l.bf16 %v1213
        %v1216 = vmul.f32 %v1214, %v1215
        %v1217 = vmul.f32 %v1088, %v1215
        %v1218 = vmul.f32 %v1189, %v1215
        %v1219 = vpack.c.bf16 %v1216, %v1216
        %v1220 = vpack.c.bf16 %v1217, %v1217
        %v1221 = vpack.c.bf16 %v1218, %v1218
        %v1222 = vunpack.c.l.bf16 %v1219
        %v1223 = vunpack.c.l.bf16 %v1220
        %v1224 = vunpack.c.l.bf16 %v1221
        %v1228 = vrot.slane %v1222, 6
        %v1229 = vrot.slane %v1223, 6
        %v1230 = vsel %vm1031, %v1228, %v1229
        %v1231 = vrot.slane %v1224, 6
        %v1232 = vsel %vm1031, %v1229, %v1231
        %v1235 = vadd.f32 %v1210, %v1230
        %v1236 = vadd.f32 %v1211, %v1232
        %v1237 = vld [vmem:[%s7] sm:$0x1]
        %v1238 = vld [vmem:[%s8] sm:$0x1]
        %1239 = vadd.xlane.f32.xlu0 %v1235
        %v1240 = vpop.xlane.xlu0 %1239
        %1241 = vadd.xlane.f32.xlu0 %v1236
        %v1242 = vpop.xlane.xlu0 %1241
        %v1243 = vmul.f32 %v1240, 0.03125
        %v1244 = vmul.f32 %v1242, 0.03125
        %v1245 = vmul.f32 %v1235, %v1235
        %v1246 = vmul.f32 %v1236, %v1236
        %1247 = vadd.xlane.f32.xlu0 %v1245
        %v1248 = vpop.xlane.xlu0 %1247
        %1249 = vadd.xlane.f32.xlu0 %v1246
        %v1250 = vpop.xlane.xlu0 %1249
        %v1251 = vmul.f32 %v1248, 0.03125
        %v1252 = vmul.f32 %v1250, 0.03125
        %v1253 = vmul.f32 %v1243, %v1243
        %v1254 = vmul.f32 %v1244, %v1244
        %v1255 = vsub.f32 %v1251, %v1253
        %v1256 = vsub.f32 %v1252, %v1254
        %v1257 = vmax.f32 %v1255, 0.0
        %v1258 = vmax.f32 %v1256, 0.0
        %v1259 = vsub.f32 %v1235, %v1243
        %v1260 = vsub.f32 %v1236, %v1244
        %v1261 = vadd.f32 %v1257, 1e-05
        %v1262 = vadd.f32 %v1258, 1e-05
        %v1263 = vrsqrt.pop %v1261
        %v1264 = vmul.f32 %v1263, %v1261
        %v1265 = vmul.f32 %v1264, %v1263
        %v1266 = vmul.f32 0.5, %v1265
        %v1267 = vsub.f32 1.5, %v1266
        %v1268 = vmul.f32 %v1263, %v1267
        %vm1269 = vweird.f32 %v1261
        %vm1270 = vweird.f32 %v1263
        %vm1271 = vmor %vm1269, %vm1270
        %v1272 = vsel %vm1271, %v1263, %v1268
        %v1273 = vrsqrt.pop %v1262
        %v1274 = vmul.f32 %v1273, %v1262
        %v1275 = vmul.f32 %v1274, %v1273
        %v1276 = vmul.f32 0.5, %v1275
        %v1277 = vsub.f32 1.5, %v1276
        %v1278 = vmul.f32 %v1273, %v1277
        %vm1279 = vweird.f32 %v1262
        %vm1280 = vweird.f32 %v1273
        %vm1281 = vmor %vm1279, %vm1280
        %v1282 = vsel %vm1281, %v1273, %v1278
        %v1283 = vmul.f32 %v1259, %v1272
        %v1284 = vmul.f32 %v1260, %v1282
        %v1286 = vperm.slane %v1237, 0
        %v1288 = vmul.f32 %v1283, %v1286
        %v1289 = vmul.f32 %v1284, %v1286
        %v1291 = vperm.slane %v1238, 0
        %v1293 = vadd.f32 %v1288, %v1291
        %v1294 = vadd.f32 %v1289, %v1291
        %v1295 = vxor.u32 %v1293, 2147483648
        %v1296 = vxor.u32 %v1294, 2147483648
        %v1297 = vmul.f32 %v1295, 1.442695
        %v1298 = vpow.pop %v1297
        %v1299 = vmul.f32 %v1296, 1.442695
        %v1300 = vpow.pop %v1299
        %v1301 = vadd.f32 %v1298, 1.0
        %v1302 = vadd.f32 %v1300, 1.0
        %v1303 = vrcp.pop %v1301
        %v1304 = vmul.f32 %v1301, %v1303
        %v1305 = vsub.f32 1.0, %v1304
        %v1306 = vmul.f32 %v1303, %v1305
        %v1307 = vadd.f32 %v1303, %v1306
        %vm1308 = vweird.f32 %v1301
        %vm1309 = vweird.f32 %v1303
        %vm1310 = vmor %vm1308, %vm1309
        %v1311 = vsel %vm1310, %v1303, %v1307
        %v1312 = vand.u32 2147483647, %v1301
        %vm1313 = vcmp.eq.f32.partialorder %v1312, 8.507059e+37
        %v1314 = vand.u32 %v1301, 2147483648
        %v1315 = vor.u32 1.1754944e-38, %v1314
        %v1316 = vsel %vm1313, %v1315, %v1311
        %v1317 = vmul.f32 1.0, %v1316
        %v1318 = vrcp.pop %v1302
        %v1319 = vmul.f32 %v1302, %v1318
        %v1320 = vsub.f32 1.0, %v1319
        %v1321 = vmul.f32 %v1318, %v1320
        %v1322 = vadd.f32 %v1318, %v1321
        %vm1323 = vweird.f32 %v1302
        %vm1324 = vweird.f32 %v1318
        %vm1325 = vmor %vm1323, %vm1324
        %v1326 = vsel %vm1325, %v1318, %v1322
        %v1327 = vand.u32 2147483647, %v1302
        %vm1328 = vcmp.eq.f32.partialorder %v1327, 8.507059e+37
        %v1329 = vand.u32 %v1302, 2147483648
        %v1330 = vor.u32 1.1754944e-38, %v1329
        %v1331 = vsel %vm1328, %v1330, %v1326
        %v1332 = vmul.f32 1.0, %v1331
        %v1333 = vmul.f32 %v1293, %v1317
        %v1334 = vmul.f32 %v1294, %v1332
        %v1335 = vpack.c.bf16 %v1334, %v1333
        %v1336 = vld [vmem:[#allocation11] sm:$0xf]
        %v1337 = vld [vmem:[#allocation11 + $0x4] sm:$0xf]
        %v1338 = vld [vmem:[#allocation11 + $0x8] sm:$0xf]
        %v1339 = vld [vmem:[#allocation11 + $0xc] sm:$0xf]
        %v1340 = vld [vmem:[#allocation11 + $0x10] sm:$0xf]
        %v1341 = vld [vmem:[#allocation11 + $0x14] sm:$0xf]
        %v1342 = vld [vmem:[#allocation11 + $0x18] sm:$0xf]
        %v1343 = vld [vmem:[#allocation11 + $0x1c] sm:$0xf]
        %v1344 = vld [vmem:[#allocation11 + $0x20] sm:$0xf]
        %v1345 = vld [vmem:[#allocation11 + $0x24] sm:$0xf]
        %v1346 = vld [vmem:[#allocation11 + $0x28] sm:$0xf]
        %v1347 = vld [vmem:[#allocation11 + $0x2c] sm:$0xf]
        %v1348 = vld [vmem:[#allocation11 + $0x30] sm:$0xf]
        %v1349 = vld [vmem:[#allocation11 + $0x34] sm:$0xf]
        %v1350 = vld [vmem:[#allocation11 + $0x38] sm:$0xf]
        %v1351 = vld [vmem:[#allocation11 + $0x3c] sm:$0xf]
        %v1352 = vld [vmem:[%s10] sm:$0x1]
        %v1354 = vperm.slane %v1352, 0
        %v1372 = vunpack.c.l.b16 %v1336
        %v1373 = vunpack.c.l.b16 %v1337
        %v1374 = vunpack.c.l.b16 %v1338
        %v1375 = vunpack.c.l.b16 %v1339
        %v1376 = vunpack.c.l.b16 %v1340
        %v1377 = vunpack.c.l.b16 %v1341
        %v1378 = vunpack.c.l.b16 %v1342
        %v1379 = vunpack.c.l.b16 %v1343
        %v1380 = vunpack.c.l.b16 %v1344
        %v1381 = vunpack.c.l.b16 %v1345
        %v1382 = vunpack.c.l.b16 %v1346
        %v1383 = vunpack.c.l.b16 %v1347
        %v1384 = vunpack.c.l.b16 %v1348
        %v1385 = vunpack.c.l.b16 %v1349
        %v1386 = vunpack.c.l.b16 %v1350
        %v1387 = vunpack.c.l.b16 %v1351
        %v1388 = vpack.c.b16 %v1373, %v1372
        %v1389 = vpack.c.b16 %v1375, %v1374
        %v1390 = vpack.c.b16 %v1377, %v1376
        %v1391 = vpack.c.b16 %v1379, %v1378
        %v1392 = vpack.c.b16 %v1381, %v1380
        %v1393 = vpack.c.b16 %v1383, %v1382
        %v1394 = vpack.c.b16 %v1385, %v1384
        %v1395 = vpack.c.b16 %v1387, %v1386
        %1404 = vmatpush.bf16.msra.mxu0 %v1395
        %1405 = vmatpush.bf16.msra.mxu0 %v1394
        %1406 = vmatpush.bf16.msra.mxu0 %v1393
        %1407 = vmatpush.bf16.msra.mxu0 %v1392
        %1408 = vmatpush.bf16.msra.mxu0 %v1391
        %1409 = vmatpush.bf16.msra.mxu0 %v1390
        %1410 = vmatpush.bf16.msra.mxu0 %v1389
        %1411 = vmatpush.bf16.msra.mxu0 %v1388
        %1412 = vmatmul.bf16.gmra.mxu0 %v1335
        %v1413 = vpop.f32.mrf.mxu0
        %v1414 = vadd.f32 %v1354, %v1413
        %v1415 = vpop.f32.mrf.mxu0
        %v1416 = vadd.f32 %v1354, %v1415
        %1417 = vdwg.mxu0
        %1418 = vst [vmem:[%s417] sm:$0xff] %v1414
        %1419 = vst [vmem:[%s417 + $0x8] sm:$0xff] %v1416
        %s1420 = sand.u32 %s260, 1
        %s1421 = scalar_lea.sflag [#allocation7], %s1420
        %s1422 = sand.u32 %s260, 1
        %s1423 = smul.addr %s1422, 16
        %s1424 = scalar_lea.vmem [#allocation13], %s1423
        // Predicated region
        $region93: #{tpu_custom_call.1} parent=59 // pred_check
          %p1425 = pneg %p270
        $region94: #{tpu_custom_call.1} parent=59 // pred_check_branch
          %1427 = sbr.rel (%p1425) target = $region96
        $region95: #{tpu_custom_call.1} parent=59 // pred_region
          %s1428 = smul.u32 2, %s33
          %1430 = vsyncadd %s1421, 0
          %s1431 = smul.addr %s32, 6
          %s1432 = sadd.s32 %s1428, %s1431
          %s1433 = smul.addr %s1432, 8
          %s1434 = scalar_lea.hbm %s11, %s1433
          %s1435 = sshll.u32 %s1424, 4
          %s1436 = int_to_ptr.vmem [resolvable:$true] %s1435
          %s1437 = sshll.u32 %s1434, 4
          %s1438 = int_to_ptr.hbm [resolvable:$true] %s1437
          %1443 = dma.vmem_to_hbm [thread:$0]  %s1436, 256, %s1438, %s1421, 128, 128, 8
        $region96: #{tpu_custom_call.1} parent=59 // pred_fallthru
          _
      $region60: #{tpu_custom_call.1} parent=5 // pred_fallthru
        _
      %p1444 = scmp.le.s32.totalorder 2, %s23
      // Predicated region
      $region97: #{tpu_custom_call.1} parent=5 // pred_check
        %p1445 = pneg %p1444
      $region98: #{tpu_custom_call.1} parent=5 // pred_check_branch
        %1447 = sbr.rel (%p1445) target = $region100
      $region99: #{tpu_custom_call.1} parent=5 // pred_region
        %s1448 = ssub.s32 %s23, 2
        // Predicated region
        $region101: #{tpu_custom_call.1} parent=99 // pred_check
          %p1449 = pneg %p276
        $region102: #{tpu_custom_call.1} parent=99 // pred_check_branch
          %1451 = sbr.rel (%p1449) target = $region104
        $region103: #{tpu_custom_call.1} parent=99 // pred_region
          %s1452 = sand.u32 %s261, 1
          %s1453 = scalar_lea.sflag [#allocation7], %s1452
          %s1454 = sand.u32 %s261, 1
          %s1455 = smul.addr %s1454, 16
          %s1456 = scalar_lea.vmem [#allocation13], %s1455
          %1458 = dma.done %s1453, 256
        $region104: #{tpu_custom_call.1} parent=99 // pred_fallthru
          _
      $region100: #{tpu_custom_call.1} parent=5 // pred_fallthru
        _
    $region6: #{tpu_custom_call.1} parent=1 // loop_footer
      %s27 = sadd.s32 1, %s23
    $region7: #{tpu_custom_call.1} parent=1 // loop_footer_branch
      %22 = sbr.rel target = $region3
    $region8: #{tpu_custom_call.1} parent=1 // loop_exit
      _
    %1459 = vsyncpa [#allocation6], 1
    %s1460 = scalar_lea.sflag [#allocation6], 1
    %1461 = vsyncpa %s1460, 1
    %1462 = vsyncpa [#allocation9], 1
    %1463 = vsyncpa [#allocation12], 1
    %1464 = vsyncpa [#allocation7], 1
    %s1465 = scalar_lea.sflag [#allocation7], 1
    %1466 = vsyncpa %s1465, 1
  %1467 = vsyncmov [#allocation3]
  %s1468 = vpop.sfrf %1467
  %p1469 = scmp.eq.s32.totalorder %s1468, 0
  %p1470 = pneg %p1469
  %1472 = shalt.err (%p1470)
  %s1473 = scalar_lea.sflag [#allocation3], 1
  %1474 = vsyncmov %s1473
  %s1475 = vpop.sfrf %1474
  %p1476 = scmp.eq.s32.totalorder %s1475, 0
  %p1477 = pneg %p1476
  %1479 = shalt.err (%p1477)

</llo_original>
